<compile_context>
chip_gen: v5e
topology: v5e:2x2
jax: 0.10.0
libtpu: 0.0.40
codegen_flags: <defaults>
</compile_context>

<pallas_src>
import functools

import numpy as np

import jax
import jax.numpy as jnp
from jax.experimental import pallas as pl
from jax.experimental.pallas import tpu as pltpu


def _erf(x):
    # Abramowitz & Stegun 7.1.26, max abs error ~1.5e-7; uses only exp (EUP-friendly)
    # so it lowers everywhere (PyTorch nn.GELU() default is the exact erf GELU).
    a1, a2, a3, a4, a5 = (0.254829592, -0.284496736, 1.421413741,
                          -1.453152027, 1.061405429)
    p = 0.3275911
    sgn = jnp.where(x >= 0.0, 1.0, -1.0)
    ax = jnp.abs(x)
    t = 1.0 / (1.0 + p * ax)
    poly = ((((a5 * t + a4) * t + a3) * t + a2) * t + a1) * t
    return sgn * (1.0 - poly * jnp.exp(-ax * ax))


def _gelu_exact(x):
    return 0.5 * x * (1.0 + _erf(x * 0.7071067811865476))


def self_block_kernel(num_heads, head_dim, approx_recip,
                      x_ref, cos_ref, ssin_ref,
                      wqkv_ref, bqkv_ref,
                      wout_ref, bout_ref,
                      w1x_ref, w1m_ref, b1_ref,
                      ln_g_ref, ln_b_ref,
                      w2_ref, b2_ref,
                      o_ref):
    H, D = num_heads, head_dim
    x = x_ref[0]                                     # (N, E)
    N, E = x.shape
    cdt = wqkv_ref.dtype                             # MXU input dtype (bf16 or f32)

    xf = x.astype(jnp.float32)
    xc = x.astype(cdt)

    # ---- fused QKV projection; columns laid out head-major [q | k | v] ----
    qkv = jnp.dot(xc, wqkv_ref[...], preferred_element_type=jnp.float32)
    qkv = qkv + bqkv_ref[...]                        # (N, 3E) f32

    cos = cos_ref[0]                                 # (N, D) f32, half-split layout
    ssin = ssin_ref[0]                               # (N, D) f32, sign pre-folded
    half = D // 2

    def rope(t):
        # half-split rotate_half: swap the two lane halves (sign lives in ssin).
        # Single lane shuffle; equivalent to pltpu.roll(t, D//2, axis=-1) * sign.
        rot = jnp.concatenate([t[:, half:], t[:, :half]], axis=-1)
        return t * cos + rot * ssin

    wout = wout_ref[...]                             # (E, E)

    # ---- attention, one head at a time (only one (N, N) f32 slab live) ----
    # TODO(synk): for LightGlue-scale N (~1-2k) add flash-style key tiling and a
    # sequence-tile grid axis; at these demo sizes a single block per head suffices.
    message = jnp.broadcast_to(bout_ref[...].astype(jnp.float32), (N, E))
    for h in range(H):
        q = rope(qkv[:, h * D:(h + 1) * D])                          # (N, D)
        k = rope(qkv[:, E + h * D:E + (h + 1) * D])
        v = qkv[:, 2 * E + h * D:2 * E + (h + 1) * D]
        # scores; 1/sqrt(D) already folded into q's weight columns / bias
        s = jax.lax.dot_general(q.astype(cdt), k.astype(cdt),
                                (((1,), (1,)), ((), ())),
                                preferred_element_type=jnp.float32)  # (N, N)
        s = s - jnp.max(s, axis=-1, keepdims=True)
        p = jnp.exp(s)
        inv = pl.reciprocal(jnp.sum(p, axis=-1, keepdims=True),
                            approx=approx_recip)
        attn = p * inv
        ctx = jnp.dot(attn.astype(cdt), v.astype(cdt),
                      preferred_element_type=jnp.float32)            # (N, D)
        # out_proj folded per head: message += ctx_h @ Wout_h  (no ctx concat)
        message = message + jnp.dot(ctx.astype(cdt),
                                    wout[h * D:(h + 1) * D, :],
                                    preferred_element_type=jnp.float32)

    # ---- FFN: cat(x, message) @ W1 expressed as two matmuls (no concat) ----
    h1 = (jnp.dot(xc, w1x_ref[...], preferred_element_type=jnp.float32)
          + jnp.dot(message.astype(cdt), w1m_ref[...],
                    preferred_element_type=jnp.float32)
          + b1_ref[...])                                             # (N, 2E) f32
    mu = jnp.mean(h1, axis=-1, keepdims=True)
    var = jnp.mean((h1 - mu) ** 2, axis=-1, keepdims=True)
    hn = (h1 - mu) * jax.lax.rsqrt(var + 1e-5)
    hn = hn * ln_g_ref[...] + ln_b_ref[...]
    g = _gelu_exact(hn)
    out = xf + jnp.dot(g.astype(cdt), w2_ref[...],
                       preferred_element_type=jnp.float32) + b2_ref[...]
    o_ref[0] = out.astype(o_ref.dtype)


def self_block(x, encoding, params, num_heads, *,
               compute_dtype=jnp.bfloat16, approx_softmax=True):
    B, N, E = x.shape
    H = num_heads
    D = E // H
    assert D % 2 == 0

    # ---- host-side weight re-layout (would be done once at model load) ----
    # interleaved rotary pairs -> half-split layout permutation of the head dim
    d_perm = np.concatenate([np.arange(0, D, 2), np.arange(1, D, 2)])

    def _rows(comp, perm):
        # Wqkv output row for (head h, dim d, comp) is h*3D + 3d + comp
        return np.concatenate([h * 3 * D + 3 * perm + comp for h in range(H)])

    col_order = np.concatenate([_rows(0, d_perm), _rows(1, d_perm),
                                _rows(2, np.arange(D))])

    scale = float(D) ** -0.5                         # softmax scale folded into q
    q_scale = jnp.concatenate([jnp.full((E,), scale, jnp.float32),
                               jnp.ones((2 * E,), jnp.float32)])

    wqkv_t = params['wqkv'].T[:, col_order] * q_scale[None, :]   # (E, 3E)
    bqkv = ((params['bqkv'][col_order] * q_scale)[None, :]).astype(jnp.float32)

    wout_t = params['wout'].T                                    # (E, E)
    w1_t = params['w1'].T                                        # (2E, 2E)
    w1x, w1m = w1_t[:E, :], w1_t[E:, :]                          # (E, 2E) each
    w2_t = params['w2'].T                                        # (2E, E)

    cdt = compute_dtype
    wqkv_t = wqkv_t.astype(cdt)
    wout_t = wout_t.astype(cdt)
    w1x = w1x.astype(cdt)
    w1m = w1m.astype(cdt)
    w2_t = w2_t.astype(cdt)

    bout = params['bout'][None, :].astype(jnp.float32)
    b1 = params['b1'][None, :].astype(jnp.float32)
    b2 = params['b2'][None, :].astype(jnp.float32)
    ln_g = params['ln_g'][None, :].astype(jnp.float32)
    ln_b = params['ln_b'][None, :].astype(jnp.float32)

    # rotary tables: permute to half-split layout; fold rotate_half's sign into sin
    cos = encoding[0, :, 0][..., d_perm].astype(jnp.float32)     # (B, N, D)
    sin = encoding[1, :, 0][..., d_perm].astype(jnp.float32)
    ssin = jnp.concatenate([-sin[..., :D // 2], sin[..., D // 2:]], axis=-1)

    def full_spec(a):
        zeros = (0,) * a.ndim
        return pl.BlockSpec(a.shape, lambda b, _z=zeros: _z)

    def per_batch(shape):
        return pl.BlockSpec((1,) + shape, lambda b: (b, 0, 0))

    kernel = functools.partial(self_block_kernel, H, D, approx_softmax)
    return pl.pallas_call(
        kernel,
        out_shape=jax.ShapeDtypeStruct((B, N, E), x.dtype),
        grid_spec=pltpu.PrefetchScalarGridSpec(
            num_scalar_prefetch=0,
            grid=(B,),
            in_specs=[
                per_batch((N, E)),      # x
                per_batch((N, D)),      # cos (half-split layout)
                per_batch((N, D)),      # signed sin (half-split layout)
                full_spec(wqkv_t), full_spec(bqkv),
                full_spec(wout_t), full_spec(bout),
                full_spec(w1x), full_spec(w1m), full_spec(b1),
                full_spec(ln_g), full_spec(ln_b),
                full_spec(w2_t), full_spec(b2),
            ],
            out_specs=per_batch((N, E)),
        ),
        compiler_params=pltpu.CompilerParams(
            dimension_semantics=("parallel",),        # use v7x's 2nd TensorCore
            vmem_limit_bytes=48 * 1024 * 1024),
    )(x, cos, ssin, wqkv_t, bqkv, wout_t, bout, w1x, w1m, b1,
      ln_g, ln_b, w2_t, b2)


# ---------------- pure-JAX reference (mirrors the PyTorch module) ----------------
def self_block_ref(x, encoding, params, num_heads):
    B, N, E = x.shape
    H = num_heads
    D = E // H
    qkv = x @ params['wqkv'].T + params['bqkv']            # (B, N, 3E)
    qkv = qkv.reshape(B, N, H, D, 3).transpose(0, 2, 1, 3, 4)
    q, k, v = qkv[..., 0], qkv[..., 1], qkv[..., 2]        # (B, H, N, D)

    def rot_half(t):
        tp = t.reshape(t.shape[:-1] + (D // 2, 2))
        return jnp.stack([-tp[..., 1], tp[..., 0]], axis=-1).reshape(t.shape)

    cosf, sinf = encoding[0], encoding[1]                  # (B, 1, N, D)
    q = q * cosf + rot_half(q) * sinf
    k = k * cosf + rot_half(k) * sinf
    sim = jnp.einsum('bhid,bhjd->bhij', q, k) * (D ** -0.5)
    attn = jax.nn.softmax(sim, axis=-1)
    ctx = jnp.einsum('bhij,bhjd->bhid', attn, v)
    ctx = ctx.transpose(0, 2, 1, 3).reshape(B, N, E)
    message = ctx @ params['wout'].T + params['bout']
    y = jnp.concatenate([x, message], axis=-1)
    h = y @ params['w1'].T + params['b1']
    mu = h.mean(-1, keepdims=True)
    var = ((h - mu) ** 2).mean(-1, keepdims=True)
    hn = (h - mu) / jnp.sqrt(var + 1e-5) * params['ln_g'] + params['ln_b']
    g = jax.nn.gelu(hn, approximate=False)
    return x + g @ params['w2'].T + params['b2']


if __name__ == "__main__":
    B, N, E, H = 2, 8, 32, 2
    D = E // H

    key = jax.random.PRNGKey(0)
    keys = jax.random.split(key, 16)

    x = jax.random.normal(keys[0], (B, N, E), dtype=jnp.float32)

    # rotary encoding: cos/sin of angles, repeated in interleaved pairs
    theta = jax.random.uniform(keys[1], (B, N, D // 2), dtype=jnp.float32) * 6.283
    cos = jnp.repeat(jnp.cos(theta), 2, axis=-1)           # (B, N, D)
    sin = jnp.repeat(jnp.sin(theta), 2, axis=-1)
    encoding = jnp.stack([cos, sin])[:, :, None]            # (2, B, 1, N, D)

    def winit(k, shape, scale=0.1):
        return scale * jax.random.normal(k, shape, dtype=jnp.float32)

    params = {
        'wqkv': winit(keys[2], (3 * E, E)),
        'bqkv': winit(keys[3], (3 * E,)),
        'wout': winit(keys[4], (E, E)),
        'bout': winit(keys[5], (E,)),
        'w1':   winit(keys[6], (2 * E, 2 * E)),
        'b1':   winit(keys[7], (2 * E,)),
        'ln_g': 1.0 + winit(keys[8], (2 * E,)),
        'ln_b': winit(keys[9], (2 * E,)),
        # nn.Linear(2E, E) stores weight as (out=E, in=2E)  (fixes prior shape bug)
        'w2':   winit(keys[10], (E, 2 * E)),
        'b2':   winit(keys[11], (E,)),
    }

    ref = self_block_ref(x, encoding, params, H)

    # precise path: f32 MXU inputs, exact reciprocal -> tight correctness check
    out_f32 = jax.block_until_ready(
        self_block(x, encoding, params, H,
                   compute_dtype=jnp.float32, approx_softmax=False))
    assert out_f32.shape == (B, N, E)
    err_f32 = float(jnp.max(jnp.abs(out_f32 - ref)))
    assert jnp.allclose(out_f32, ref, atol=5e-4, rtol=5e-4), err_f32

    # fast (default) path: bf16 MXU inputs with f32 accumulation, approx reciprocal
    out_fast = jax.block_until_ready(self_block(x, encoding, params, H))
    err_fast = float(jnp.max(jnp.abs(out_fast - ref)))
    assert jnp.allclose(out_fast, ref, atol=1e-1, rtol=1e-1), err_fast

    print("KERNEL_OK")
</pallas_src>

<mosaic_0001>
module attributes {stable_mosaic.version = 11 : i64} {
  func.func @self_block_kernel(%arg0: i32, %arg1: memref<1x8x32xf32, #tpu.memory_space<vmem>>, %arg2: memref<1x8x16xf32, #tpu.memory_space<vmem>>, %arg3: memref<1x8x16xf32, #tpu.memory_space<vmem>>, %arg4: memref<32x96xf32, #tpu.memory_space<vmem>>, %arg5: memref<1x96xf32, #tpu.memory_space<vmem>>, %arg6: memref<32x32xf32, #tpu.memory_space<vmem>>, %arg7: memref<1x32xf32, #tpu.memory_space<vmem>>, %arg8: memref<32x64xf32, #tpu.memory_space<vmem>>, %arg9: memref<32x64xf32, #tpu.memory_space<vmem>>, %arg10: memref<1x64xf32, #tpu.memory_space<vmem>>, %arg11: memref<1x64xf32, #tpu.memory_space<vmem>>, %arg12: memref<1x64xf32, #tpu.memory_space<vmem>>, %arg13: memref<64x32xf32, #tpu.memory_space<vmem>>, %arg14: memref<1x32xf32, #tpu.memory_space<vmem>>, %arg15: memref<1x8x32xf32, #tpu.memory_space<vmem>>) attributes {dimension_semantics = [#tpu.dimension_semantics<parallel>], iteration_bounds = array<i64: 2>, scalar_prefetch = 0 : i64, scratch_operands = 0 : i64, tpu.core_type = #tpu.core_type<tc>, window_params = [{transform_indices = @transform_0, window_bounds = array<i64: 1, 8, 32>}, {transform_indices = @transform_1, window_bounds = array<i64: 1, 8, 16>}, {transform_indices = @transform_2, window_bounds = array<i64: 1, 8, 16>}, {pipeline_mode = #tpu.pipeline_mode<synchronous>, transform_indices = @transform_3, window_bounds = array<i64: 32, 96>}, {pipeline_mode = #tpu.pipeline_mode<synchronous>, transform_indices = @transform_4, window_bounds = array<i64: 1, 96>}, {pipeline_mode = #tpu.pipeline_mode<synchronous>, transform_indices = @transform_5, window_bounds = array<i64: 32, 32>}, {pipeline_mode = #tpu.pipeline_mode<synchronous>, transform_indices = @transform_6, window_bounds = array<i64: 1, 32>}, {pipeline_mode = #tpu.pipeline_mode<synchronous>, transform_indices = @transform_7, window_bounds = array<i64: 32, 64>}, {pipeline_mode = #tpu.pipeline_mode<synchronous>, transform_indices = @transform_8, window_bounds = array<i64: 32, 64>}, {pipeline_mode = #tpu.pipeline_mode<synchronous>, transform_indices = @transform_9, window_bounds = array<i64: 1, 64>}, {pipeline_mode = #tpu.pipeline_mode<synchronous>, transform_indices = @transform_10, window_bounds = array<i64: 1, 64>}, {pipeline_mode = #tpu.pipeline_mode<synchronous>, transform_indices = @transform_11, window_bounds = array<i64: 1, 64>}, {pipeline_mode = #tpu.pipeline_mode<synchronous>, transform_indices = @transform_12, window_bounds = array<i64: 64, 32>}, {pipeline_mode = #tpu.pipeline_mode<synchronous>, transform_indices = @transform_13, window_bounds = array<i64: 1, 32>}, {transform_indices = @transform_14, window_bounds = array<i64: 1, 8, 32>}]} {
    %c0 = arith.constant 0 : index
    %c0_0 = arith.constant 0 : index
    %c0_1 = arith.constant 0 : index
    %0 = vector.load %arg1[%c0, %c0_0, %c0_1] : memref<1x8x32xf32, #tpu.memory_space<vmem>>, vector<1x8x32xf32>
    %1 = vector.shape_cast %0 : vector<1x8x32xf32> to vector<8x32xf32>
    %c0_2 = arith.constant 0 : index
    %c0_3 = arith.constant 0 : index
    %2 = vector.load %arg4[%c0_2, %c0_3] : memref<32x96xf32, #tpu.memory_space<vmem>>, vector<32x96xf32>
    %cst = arith.constant dense<0.000000e+00> : vector<8x96xf32>
    %3 = tpu.matmul %1, %2, %cst {dimension_numbers = #tpu.dot_dimension_numbers<[1], [0], [0], [1], [0, 0, 1, 1], [], []>} : vector<8x32xf32>, vector<32x96xf32>, vector<8x96xf32> -> vector<8x96xf32>
    %c0_4 = arith.constant 0 : index
    %c0_5 = arith.constant 0 : index
    %4 = vector.load %arg5[%c0_4, %c0_5] : memref<1x96xf32, #tpu.memory_space<vmem>>, vector<1x96xf32>
    %5 = vector.broadcast %4 : vector<1x96xf32> to vector<8x96xf32>
    %6 = arith.addf %3, %5 : vector<8x96xf32>
    %c0_6 = arith.constant 0 : index
    %c0_7 = arith.constant 0 : index
    %c0_8 = arith.constant 0 : index
    %7 = vector.load %arg2[%c0_6, %c0_7, %c0_8] : memref<1x8x16xf32, #tpu.memory_space<vmem>>, vector<1x8x16xf32>
    %8 = vector.shape_cast %7 : vector<1x8x16xf32> to vector<8x16xf32>
    %c0_9 = arith.constant 0 : index
    %c0_10 = arith.constant 0 : index
    %c0_11 = arith.constant 0 : index
    %9 = vector.load %arg3[%c0_9, %c0_10, %c0_11] : memref<1x8x16xf32, #tpu.memory_space<vmem>>, vector<1x8x16xf32>
    %10 = vector.shape_cast %9 : vector<1x8x16xf32> to vector<8x16xf32>
    %c0_12 = arith.constant 0 : index
    %c0_13 = arith.constant 0 : index
    %11 = vector.load %arg6[%c0_12, %c0_13] : memref<32x32xf32, #tpu.memory_space<vmem>>, vector<32x32xf32>
    %c0_14 = arith.constant 0 : index
    %c0_15 = arith.constant 0 : index
    %12 = vector.load %arg7[%c0_14, %c0_15] : memref<1x32xf32, #tpu.memory_space<vmem>>, vector<1x32xf32>
    %13 = vector.shape_cast %12 : vector<1x32xf32> to vector<1x32xf32>
    %14 = vector.broadcast %13 : vector<1x32xf32> to vector<8x32xf32>
    %15 = vector.extract_strided_slice %6 {offsets = [0, 0], sizes = [8, 16], strides = [1, 1]} : vector<8x96xf32> to vector<8x16xf32>
    %16 = vector.extract_strided_slice %15 {offsets = [0, 8], sizes = [8, 8], strides = [1, 1]} : vector<8x16xf32> to vector<8x8xf32>
    %17 = vector.extract_strided_slice %15 {offsets = [0, 0], sizes = [8, 8], strides = [1, 1]} : vector<8x16xf32> to vector<8x8xf32>
    %18 = tpu.concatenate %16, %17 in 1 : vector<8x8xf32>, vector<8x8xf32> -> vector<8x16xf32>
    %19 = arith.mulf %15, %8 : vector<8x16xf32>
    %20 = arith.mulf %18, %10 : vector<8x16xf32>
    %21 = arith.addf %19, %20 : vector<8x16xf32>
    %22 = vector.extract_strided_slice %6 {offsets = [0, 32], sizes = [8, 16], strides = [1, 1]} : vector<8x96xf32> to vector<8x16xf32>
    %23 = vector.extract_strided_slice %22 {offsets = [0, 8], sizes = [8, 8], strides = [1, 1]} : vector<8x16xf32> to vector<8x8xf32>
    %24 = vector.extract_strided_slice %22 {offsets = [0, 0], sizes = [8, 8], strides = [1, 1]} : vector<8x16xf32> to vector<8x8xf32>
    %25 = tpu.concatenate %23, %24 in 1 : vector<8x8xf32>, vector<8x8xf32> -> vector<8x16xf32>
    %26 = arith.mulf %22, %8 : vector<8x16xf32>
    %27 = arith.mulf %25, %10 : vector<8x16xf32>
    %28 = arith.addf %26, %27 : vector<8x16xf32>
    %29 = vector.extract_strided_slice %6 {offsets = [0, 64], sizes = [8, 16], strides = [1, 1]} : vector<8x96xf32> to vector<8x16xf32>
    %cst_16 = arith.constant dense<0.000000e+00> : vector<8x8xf32>
    %30 = tpu.matmul %21, %28, %cst_16 {dimension_numbers = #tpu.dot_dimension_numbers<[1], [1], [0], [0], [0, 0, 1, 0], [], []>} : vector<8x16xf32>, vector<8x16xf32>, vector<8x8xf32> -> vector<8x8xf32>
    %cst_17 = arith.constant dense<0xFF800000> : vector<8xf32>
    %31 = vector.multi_reduction <maximumf>, %30, %cst_17 [1] : vector<8x8xf32> to vector<8xf32>
    %32 = vector.shape_cast %31 : vector<8xf32> to vector<8x1xf32>
    %33 = vector.broadcast %32 : vector<8x1xf32> to vector<8x8xf32>
    %34 = arith.subf %30, %33 : vector<8x8xf32>
    %35 = math.exp %34 : vector<8x8xf32>
    %cst_18 = arith.constant dense<0.000000e+00> : vector<8xf32>
    %36 = vector.multi_reduction <add>, %35, %cst_18 [1] : vector<8x8xf32> to vector<8xf32>
    %37 = vector.shape_cast %36 : vector<8xf32> to vector<8x1xf32>
    %38 = tpu.reciprocal %37 : vector<8x1xf32> -> vector<8x1xf32>
    %39 = vector.broadcast %38 : vector<8x1xf32> to vector<8x8xf32>
    %40 = arith.mulf %35, %39 : vector<8x8xf32>
    %cst_19 = arith.constant dense<0.000000e+00> : vector<8x16xf32>
    %41 = tpu.matmul %40, %29, %cst_19 {dimension_numbers = #tpu.dot_dimension_numbers<[1], [0], [0], [1], [0, 0, 1, 1], [], []>} : vector<8x8xf32>, vector<8x16xf32>, vector<8x16xf32> -> vector<8x16xf32>
    %42 = vector.extract_strided_slice %11 {offsets = [0, 0], sizes = [16, 32], strides = [1, 1]} : vector<32x32xf32> to vector<16x32xf32>
    %cst_20 = arith.constant dense<0.000000e+00> : vector<8x32xf32>
    %43 = tpu.matmul %41, %42, %cst_20 {dimension_numbers = #tpu.dot_dimension_numbers<[1], [0], [0], [1], [0, 0, 1, 1], [], []>} : vector<8x16xf32>, vector<16x32xf32>, vector<8x32xf32> -> vector<8x32xf32>
    %44 = arith.addf %14, %43 : vector<8x32xf32>
    %45 = vector.extract_strided_slice %6 {offsets = [0, 16], sizes = [8, 16], strides = [1, 1]} : vector<8x96xf32> to vector<8x16xf32>
    %46 = vector.extract_strided_slice %45 {offsets = [0, 8], sizes = [8, 8], strides = [1, 1]} : vector<8x16xf32> to vector<8x8xf32>
    %47 = vector.extract_strided_slice %45 {offsets = [0, 0], sizes = [8, 8], strides = [1, 1]} : vector<8x16xf32> to vector<8x8xf32>
    %48 = tpu.concatenate %46, %47 in 1 : vector<8x8xf32>, vector<8x8xf32> -> vector<8x16xf32>
    %49 = arith.mulf %45, %8 : vector<8x16xf32>
    %50 = arith.mulf %48, %10 : vector<8x16xf32>
    %51 = arith.addf %49, %50 : vector<8x16xf32>
    %52 = vector.extract_strided_slice %6 {offsets = [0, 48], sizes = [8, 16], strides = [1, 1]} : vector<8x96xf32> to vector<8x16xf32>
    %53 = vector.extract_strided_slice %52 {offsets = [0, 8], sizes = [8, 8], strides = [1, 1]} : vector<8x16xf32> to vector<8x8xf32>
    %54 = vector.extract_strided_slice %52 {offsets = [0, 0], sizes = [8, 8], strides = [1, 1]} : vector<8x16xf32> to vector<8x8xf32>
    %55 = tpu.concatenate %53, %54 in 1 : vector<8x8xf32>, vector<8x8xf32> -> vector<8x16xf32>
    %56 = arith.mulf %52, %8 : vector<8x16xf32>
    %57 = arith.mulf %55, %10 : vector<8x16xf32>
    %58 = arith.addf %56, %57 : vector<8x16xf32>
    %59 = vector.extract_strided_slice %6 {offsets = [0, 80], sizes = [8, 16], strides = [1, 1]} : vector<8x96xf32> to vector<8x16xf32>
    %cst_21 = arith.constant dense<0.000000e+00> : vector<8x8xf32>
    %60 = tpu.matmul %51, %58, %cst_21 {dimension_numbers = #tpu.dot_dimension_numbers<[1], [1], [0], [0], [0, 0, 1, 0], [], []>} : vector<8x16xf32>, vector<8x16xf32>, vector<8x8xf32> -> vector<8x8xf32>
    %cst_22 = arith.constant dense<0xFF800000> : vector<8xf32>
    %61 = vector.multi_reduction <maximumf>, %60, %cst_22 [1] : vector<8x8xf32> to vector<8xf32>
    %62 = vector.shape_cast %61 : vector<8xf32> to vector<8x1xf32>
    %63 = vector.broadcast %62 : vector<8x1xf32> to vector<8x8xf32>
    %64 = arith.subf %60, %63 : vector<8x8xf32>
    %65 = math.exp %64 : vector<8x8xf32>
    %cst_23 = arith.constant dense<0.000000e+00> : vector<8xf32>
    %66 = vector.multi_reduction <add>, %65, %cst_23 [1] : vector<8x8xf32> to vector<8xf32>
    %67 = vector.shape_cast %66 : vector<8xf32> to vector<8x1xf32>
    %68 = tpu.reciprocal %67 : vector<8x1xf32> -> vector<8x1xf32>
    %69 = vector.broadcast %68 : vector<8x1xf32> to vector<8x8xf32>
    %70 = arith.mulf %65, %69 : vector<8x8xf32>
    %cst_24 = arith.constant dense<0.000000e+00> : vector<8x16xf32>
    %71 = tpu.matmul %70, %59, %cst_24 {dimension_numbers = #tpu.dot_dimension_numbers<[1], [0], [0], [1], [0, 0, 1, 1], [], []>} : vector<8x8xf32>, vector<8x16xf32>, vector<8x16xf32> -> vector<8x16xf32>
    %72 = vector.extract_strided_slice %11 {offsets = [16, 0], sizes = [16, 32], strides = [1, 1]} : vector<32x32xf32> to vector<16x32xf32>
    %cst_25 = arith.constant dense<0.000000e+00> : vector<8x32xf32>
    %73 = tpu.matmul %71, %72, %cst_25 {dimension_numbers = #tpu.dot_dimension_numbers<[1], [0], [0], [1], [0, 0, 1, 1], [], []>} : vector<8x16xf32>, vector<16x32xf32>, vector<8x32xf32> -> vector<8x32xf32>
    %74 = arith.addf %44, %73 : vector<8x32xf32>
    %c0_26 = arith.constant 0 : index
    %c0_27 = arith.constant 0 : index
    %75 = vector.load %arg8[%c0_26, %c0_27] : memref<32x64xf32, #tpu.memory_space<vmem>>, vector<32x64xf32>
    %cst_28 = arith.constant dense<0.000000e+00> : vector<8x64xf32>
    %76 = tpu.matmul %1, %75, %cst_28 {dimension_numbers = #tpu.dot_dimension_numbers<[1], [0], [0], [1], [0, 0, 1, 1], [], []>} : vector<8x32xf32>, vector<32x64xf32>, vector<8x64xf32> -> vector<8x64xf32>
    %c0_29 = arith.constant 0 : index
    %c0_30 = arith.constant 0 : index
    %77 = vector.load %arg9[%c0_29, %c0_30] : memref<32x64xf32, #tpu.memory_space<vmem>>, vector<32x64xf32>
    %cst_31 = arith.constant dense<0.000000e+00> : vector<8x64xf32>
    %78 = tpu.matmul %74, %77, %cst_31 {dimension_numbers = #tpu.dot_dimension_numbers<[1], [0], [0], [1], [0, 0, 1, 1], [], []>} : vector<8x32xf32>, vector<32x64xf32>, vector<8x64xf32> -> vector<8x64xf32>
    %79 = arith.addf %76, %78 : vector<8x64xf32>
    %c0_32 = arith.constant 0 : index
    %c0_33 = arith.constant 0 : index
    %80 = vector.load %arg10[%c0_32, %c0_33] : memref<1x64xf32, #tpu.memory_space<vmem>>, vector<1x64xf32>
    %81 = vector.broadcast %80 : vector<1x64xf32> to vector<8x64xf32>
    %82 = arith.addf %79, %81 : vector<8x64xf32>
    %cst_34 = arith.constant dense<0.000000e+00> : vector<8xf32>
    %83 = vector.multi_reduction <add>, %82, %cst_34 [1] : vector<8x64xf32> to vector<8xf32>
    %84 = vector.shape_cast %83 : vector<8xf32> to vector<8x1xf32>
    %cst_35 = arith.constant 6.400000e+01 : f32
    %85 = vector.broadcast %cst_35 : f32 to vector<8x1xf32>
    %86 = arith.divf %84, %85 : vector<8x1xf32>
    %87 = vector.broadcast %86 : vector<8x1xf32> to vector<8x64xf32>
    %88 = arith.subf %82, %87 : vector<8x64xf32>
    %89 = arith.mulf %88, %88 : vector<8x64xf32>
    %cst_36 = arith.constant dense<0.000000e+00> : vector<8xf32>
    %90 = vector.multi_reduction <add>, %89, %cst_36 [1] : vector<8x64xf32> to vector<8xf32>
    %91 = vector.shape_cast %90 : vector<8xf32> to vector<8x1xf32>
    %cst_37 = arith.constant 6.400000e+01 : f32
    %92 = vector.broadcast %cst_37 : f32 to vector<8x1xf32>
    %93 = arith.divf %91, %92 : vector<8x1xf32>
    %94 = vector.broadcast %86 : vector<8x1xf32> to vector<8x64xf32>
    %95 = arith.subf %82, %94 : vector<8x64xf32>
    %cst_38 = arith.constant 9.99999974E-6 : f32
    %96 = vector.broadcast %cst_38 : f32 to vector<8x1xf32>
    %97 = arith.addf %93, %96 : vector<8x1xf32>
    %98 = math.rsqrt %97 : vector<8x1xf32>
    %99 = vector.broadcast %98 : vector<8x1xf32> to vector<8x64xf32>
    %100 = arith.mulf %95, %99 : vector<8x64xf32>
    %c0_39 = arith.constant 0 : index
    %c0_40 = arith.constant 0 : index
    %101 = vector.load %arg11[%c0_39, %c0_40] : memref<1x64xf32, #tpu.memory_space<vmem>>, vector<1x64xf32>
    %102 = vector.broadcast %101 : vector<1x64xf32> to vector<8x64xf32>
    %103 = arith.mulf %100, %102 : vector<8x64xf32>
    %c0_41 = arith.constant 0 : index
    %c0_42 = arith.constant 0 : index
    %104 = vector.load %arg12[%c0_41, %c0_42] : memref<1x64xf32, #tpu.memory_space<vmem>>, vector<1x64xf32>
    %105 = vector.broadcast %104 : vector<1x64xf32> to vector<8x64xf32>
    %106 = arith.addf %103, %105 : vector<8x64xf32>
    %cst_43 = arith.constant 5.000000e-01 : f32
    %107 = vector.broadcast %cst_43 : f32 to vector<8x64xf32>
    %108 = arith.mulf %107, %106 : vector<8x64xf32>
    %cst_44 = arith.constant 0.707106769 : f32
    %109 = vector.broadcast %cst_44 : f32 to vector<8x64xf32>
    %110 = arith.mulf %106, %109 : vector<8x64xf32>
    %cst_45 = arith.constant 0.000000e+00 : f32
    %111 = vector.broadcast %cst_45 : f32 to vector<8x64xf32>
    %112 = arith.cmpf oge, %110, %111 : vector<8x64xf32>
    %cst_46 = arith.constant 1.000000e+00 : f32
    %cst_47 = arith.constant -1.000000e+00 : f32
    %113 = vector.broadcast %cst_46 : f32 to vector<8x64xf32>
    %114 = vector.broadcast %cst_47 : f32 to vector<8x64xf32>
    %115 = arith.select %112, %113, %114 : vector<8x64xi1>, vector<8x64xf32>
    %116 = math.absf %110 : vector<8x64xf32>
    %cst_48 = arith.constant 0.327591091 : f32
    %117 = vector.broadcast %cst_48 : f32 to vector<8x64xf32>
    %118 = arith.mulf %117, %116 : vector<8x64xf32>
    %cst_49 = arith.constant 1.000000e+00 : f32
    %119 = vector.broadcast %cst_49 : f32 to vector<8x64xf32>
    %120 = arith.addf %119, %118 : vector<8x64xf32>
    %cst_50 = arith.constant 1.000000e+00 : f32
    %121 = vector.broadcast %cst_50 : f32 to vector<8x64xf32>
    %122 = arith.divf %121, %120 : vector<8x64xf32>
    %cst_51 = arith.constant 1.06140542 : f32
    %123 = vector.broadcast %cst_51 : f32 to vector<8x64xf32>
    %124 = arith.mulf %123, %122 : vector<8x64xf32>
    %cst_52 = arith.constant -1.45315206 : f32
    %125 = vector.broadcast %cst_52 : f32 to vector<8x64xf32>
    %126 = arith.addf %124, %125 : vector<8x64xf32>
    %127 = arith.mulf %126, %122 : vector<8x64xf32>
    %cst_53 = arith.constant 1.42141378 : f32
    %128 = vector.broadcast %cst_53 : f32 to vector<8x64xf32>
    %129 = arith.addf %127, %128 : vector<8x64xf32>
    %130 = arith.mulf %129, %122 : vector<8x64xf32>
    %cst_54 = arith.constant -0.284496725 : f32
    %131 = vector.broadcast %cst_54 : f32 to vector<8x64xf32>
    %132 = arith.addf %130, %131 : vector<8x64xf32>
    %133 = arith.mulf %132, %122 : vector<8x64xf32>
    %cst_55 = arith.constant 0.254829586 : f32
    %134 = vector.broadcast %cst_55 : f32 to vector<8x64xf32>
    %135 = arith.addf %133, %134 : vector<8x64xf32>
    %136 = arith.mulf %135, %122 : vector<8x64xf32>
    %cst_56 = arith.constant 0.000000e+00 : f32
    %137 = vector.broadcast %cst_56 : f32 to vector<8x64xf32>
    %138 = arith.subf %137, %116 : vector<8x64xf32>
    %139 = arith.mulf %138, %116 : vector<8x64xf32>
    %140 = math.exp %139 : vector<8x64xf32>
    %141 = arith.mulf %136, %140 : vector<8x64xf32>
    %cst_57 = arith.constant 1.000000e+00 : f32
    %142 = vector.broadcast %cst_57 : f32 to vector<8x64xf32>
    %143 = arith.subf %142, %141 : vector<8x64xf32>
    %144 = arith.mulf %115, %143 : vector<8x64xf32>
    %cst_58 = arith.constant 1.000000e+00 : f32
    %145 = vector.broadcast %cst_58 : f32 to vector<8x64xf32>
    %146 = arith.addf %145, %144 : vector<8x64xf32>
    %147 = arith.mulf %108, %146 : vector<8x64xf32>
    %c0_59 = arith.constant 0 : index
    %c0_60 = arith.constant 0 : index
    %148 = vector.load %arg13[%c0_59, %c0_60] : memref<64x32xf32, #tpu.memory_space<vmem>>, vector<64x32xf32>
    %cst_61 = arith.constant dense<0.000000e+00> : vector<8x32xf32>
    %149 = tpu.matmul %147, %148, %cst_61 {dimension_numbers = #tpu.dot_dimension_numbers<[1], [0], [0], [1], [0, 0, 1, 1], [], []>} : vector<8x64xf32>, vector<64x32xf32>, vector<8x32xf32> -> vector<8x32xf32>
    %150 = arith.addf %1, %149 : vector<8x32xf32>
    %c0_62 = arith.constant 0 : index
    %c0_63 = arith.constant 0 : index
    %151 = vector.load %arg14[%c0_62, %c0_63] : memref<1x32xf32, #tpu.memory_space<vmem>>, vector<1x32xf32>
    %152 = vector.broadcast %151 : vector<1x32xf32> to vector<8x32xf32>
    %153 = arith.addf %150, %152 : vector<8x32xf32>
    %c0_64 = arith.constant 0 : index
    %c0_65 = arith.constant 0 : index
    %c0_66 = arith.constant 0 : index
    %154 = vector.load %arg15[%c0_64, %c0_65, %c0_66] : memref<1x8x32xf32, #tpu.memory_space<vmem>>, vector<1x8x32xf32>
    %155 = vector.shape_cast %154 : vector<1x8x32xf32> to vector<8x32xf32>
    %156 = vector.shape_cast %153 : vector<8x32xf32> to vector<1x8x32xf32>
    tpu.vector_store %arg15[%c0_64, %c0_65, %c0_66], %156 {strides = array<i32>} : memref<1x8x32xf32, #tpu.memory_space<vmem>>, vector<1x8x32xf32>,
    return
  }
  func.func @transform_0(%arg0: i32) -> (i32, i32, i32) {
    %c0_i32 = arith.constant 0 : i32
    %c0_i32_0 = arith.constant 0 : i32
    %c0_i32_1 = arith.constant 0 : i32
    return %arg0, %c0_i32, %c0_i32_0 : i32, i32, i32
  }
  func.func @transform_1(%arg0: i32) -> (i32, i32, i32) {
    %c0_i32 = arith.constant 0 : i32
    %c0_i32_0 = arith.constant 0 : i32
    %c0_i32_1 = arith.constant 0 : i32
    return %arg0, %c0_i32, %c0_i32_0 : i32, i32, i32
  }
  func.func @transform_2(%arg0: i32) -> (i32, i32, i32) {
    %c0_i32 = arith.constant 0 : i32
    %c0_i32_0 = arith.constant 0 : i32
    %c0_i32_1 = arith.constant 0 : i32
    return %arg0, %c0_i32, %c0_i32_0 : i32, i32, i32
  }
  func.func @transform_3(%arg0: i32) -> (i32, i32) {
    %c0_i32 = arith.constant 0 : i32
    %c0_i32_0 = arith.constant 0 : i32
    %c0_i32_1 = arith.constant 0 : i32
    return %c0_i32, %c0_i32_0 : i32, i32
  }
  func.func @transform_4(%arg0: i32) -> (i32, i32) {
    %c0_i32 = arith.constant 0 : i32
    %c0_i32_0 = arith.constant 0 : i32
    %c0_i32_1 = arith.constant 0 : i32
    return %c0_i32, %c0_i32_0 : i32, i32
  }
  func.func @transform_5(%arg0: i32) -> (i32, i32) {
    %c0_i32 = arith.constant 0 : i32
    %c0_i32_0 = arith.constant 0 : i32
    %c0_i32_1 = arith.constant 0 : i32
    return %c0_i32, %c0_i32_0 : i32, i32
  }
  func.func @transform_6(%arg0: i32) -> (i32, i32) {
    %c0_i32 = arith.constant 0 : i32
    %c0_i32_0 = arith.constant 0 : i32
    %c0_i32_1 = arith.constant 0 : i32
    return %c0_i32, %c0_i32_0 : i32, i32
  }
  func.func @transform_7(%arg0: i32) -> (i32, i32) {
    %c0_i32 = arith.constant 0 : i32
    %c0_i32_0 = arith.constant 0 : i32
    %c0_i32_1 = arith.constant 0 : i32
    return %c0_i32, %c0_i32_0 : i32, i32
  }
  func.func @transform_8(%arg0: i32) -> (i32, i32) {
    %c0_i32 = arith.constant 0 : i32
    %c0_i32_0 = arith.constant 0 : i32
    %c0_i32_1 = arith.constant 0 : i32
    return %c0_i32, %c0_i32_0 : i32, i32
  }
  func.func @transform_9(%arg0: i32) -> (i32, i32) {
    %c0_i32 = arith.constant 0 : i32
    %c0_i32_0 = arith.constant 0 : i32
    %c0_i32_1 = arith.constant 0 : i32
    return %c0_i32, %c0_i32_0 : i32, i32
  }
  func.func @transform_10(%arg0: i32) -> (i32, i32) {
    %c0_i32 = arith.constant 0 : i32
    %c0_i32_0 = arith.constant 0 : i32
    %c0_i32_1 = arith.constant 0 : i32
    return %c0_i32, %c0_i32_0 : i32, i32
  }
  func.func @transform_11(%arg0: i32) -> (i32, i32) {
    %c0_i32 = arith.constant 0 : i32
    %c0_i32_0 = arith.constant 0 : i32
    %c0_i32_1 = arith.constant 0 : i32
    return %c0_i32, %c0_i32_0 : i32, i32
  }
  func.func @transform_12(%arg0: i32) -> (i32, i32) {
    %c0_i32 = arith.constant 0 : i32
    %c0_i32_0 = arith.constant 0 : i32
    %c0_i32_1 = arith.constant 0 : i32
    return %c0_i32, %c0_i32_0 : i32, i32
  }
  func.func @transform_13(%arg0: i32) -> (i32, i32) {
    %c0_i32 = arith.constant 0 : i32
    %c0_i32_0 = arith.constant 0 : i32
    %c0_i32_1 = arith.constant 0 : i32
    return %c0_i32, %c0_i32_0 : i32, i32
  }
  func.func @transform_14(%arg0: i32) -> (i32, i32, i32) {
    %c0_i32 = arith.constant 0 : i32
    %c0_i32_0 = arith.constant 0 : i32
    %c0_i32_1 = arith.constant 0 : i32
    return %arg0, %c0_i32, %c0_i32_0 : i32, i32, i32
  }
}

</mosaic_0001>

<llo_original>
// kernel: tpu_custom_call.1
$region0: #{tpu_custom_call.1}
  #allocation0 [shape = 'u32[]', space=smem, size = 0x4, offset = 0x4, fixed_abs, tag = 'smem constant byte address 0x4 - core index']
  #allocation1 [shape = 'u32[72,128]{1,0:T(1,128)}', space=vmem, size = 0x9000, scoped, tag = 'internal scratch']
  %s0 = inlined_call_operand.hbm [shape: f32[2,8,32], index: 0, kind: input, shape index: {}]
  %s1 = inlined_call_operand.hbm [shape: f32[2,8,16], index: 1, kind: input, shape index: {}]
  %s2 = inlined_call_operand.hbm [shape: f32[2,8,16], index: 2, kind: input, shape index: {}]
  %s3 = inlined_call_operand.vmem [shape: f32[32,96], index: 3, kind: input, shape index: {}]
  %s4 = inlined_call_operand.vmem [shape: f32[1,96], index: 4, kind: input, shape index: {}]
  %s5 = inlined_call_operand.vmem [shape: f32[32,32], index: 5, kind: input, shape index: {}]
  %s6 = inlined_call_operand.vmem [shape: f32[1,32], index: 6, kind: input, shape index: {}]
  %s7 = inlined_call_operand.vmem [shape: f32[32,64], index: 7, kind: input, shape index: {}]
  %s8 = inlined_call_operand.hbm [shape: f32[32,64], index: 8, kind: input, shape index: {}]
  %s9 = inlined_call_operand.vmem [shape: f32[1,64], index: 9, kind: input, shape index: {}]
  %s10 = inlined_call_operand.vmem [shape: f32[1,64], index: 10, kind: input, shape index: {}]
  %s11 = inlined_call_operand.vmem [shape: f32[1,64], index: 11, kind: input, shape index: {}]
  %s12 = inlined_call_operand.vmem [shape: f32[64,32], index: 12, kind: input, shape index: {}]
  %s13 = inlined_call_operand.vmem [shape: f32[1,32], index: 13, kind: input, shape index: {}]
  %s14 = inlined_call_operand.hbm [shape: f32[2,8,32], index: 14, kind: output, shape index: {}]
  %s15 = sld [smem:[#allocation0]]
  $region105: #{tpu_custom_call.1} parent=0
    _
  %s17 = ssub.s32 1, %s15
  %s18 = scalar_select 0, %s17, %s15
  $region1: #{tpu_custom_call.1} parent=0
    #allocation2 [shape = 'u8[8192]{0}', space=vmem, size = 0x2000, scoped, tag = 'input window, operand 0']
    #allocation3 [shape = 's32[2]{0}', space=sflag, size = 0x8, scoped, tag = 'scoped memory for tpu_custom_call.1']
    #allocation4 [shape = 's32[2]{0}', space=sflag, size = 0x8, scoped, tag = 'scoped memory for tpu_custom_call.1']
    #allocation5 [shape = 'u8[8192]{0}', space=vmem, size = 0x2000, scoped, tag = 'input window, operand 1']
    #allocation6 [shape = 's32[2]{0}', space=sflag, size = 0x8, scoped, tag = 'scoped memory for tpu_custom_call.1']
    #allocation7 [shape = 'u8[8192]{0}', space=vmem, size = 0x2000, scoped, tag = 'input window, operand 2']
    #allocation8 [shape = 'u8[16384]{0}', space=vmem, size = 0x4000, scoped, tag = 'input window, operand 8, single buffered']
    #allocation9 [shape = 's32[1]{0}', space=sflag, size = 0x4, scoped, tag = 'scoped memory for tpu_custom_call.1']
    #allocation10 [shape = 'u8[8192]{0}', space=vmem, size = 0x2000, scoped, tag = 'output window, operand 0']
    %19 = vsyncpa [#allocation3], 0
    %s20 = scalar_lea.sflag [#allocation3], 1
    %21 = vsyncpa %s20, 0
    %22 = vsyncpa [#allocation6], 0
    %s23 = scalar_lea.sflag [#allocation6], 1
    %24 = vsyncpa %s23, 0
    %25 = vsyncpa [#allocation9], 0
    %26 = vsyncpa [#allocation4], 0
    %s27 = scalar_lea.sflag [#allocation4], 1
    %28 = vsyncpa %s27, 0
    loop: start=0, step=1, limit=4
    $region2: #{tpu_custom_call.1} parent=1 // loop_pre_header
      _
    $region3: #{tpu_custom_call.1} parent=1 // loop_header
      %s30 = sphi 0, %s34
      %p31 = scmp.ge.s32.totalorder %s30, 4
      %s40 = sphi 0, %s42
      %s43 = sphi 0, %s40
      %s44 = sphi 0, %s43
      %s60 = sphi 0, %s44
      %s66 = sphi 0, %s68
      %s69 = sphi 0, %s66
      %s70 = sphi 0, %s69
      %s86 = sphi 0, %s70
      %s92 = sphi 0, %s94
      %s95 = sphi 0, %s92
      %s96 = sphi 0, %s95
      %s112 = sphi 0, %s96
      %s116 = sphi 0, %s116
      %s118 = sphi 0, %s116
      %s119 = sphi 0, %s118
      %s133 = sphi 0, %s119
      %s137 = sphi 0, %s137
      %s139 = sphi 0, %s137
      %s140 = sphi 0, %s139
      %s154 = sphi 0, %s140
      %s158 = sphi 0, %s158
      %s160 = sphi 0, %s158
      %s161 = sphi 0, %s160
      %s175 = sphi 0, %s161
      %s179 = sphi 0, %s179
      %s181 = sphi 0, %s179
      %s182 = sphi 0, %s181
      %s196 = sphi 0, %s182
      %s200 = sphi 0, %s200
      %s202 = sphi 0, %s200
      %s203 = sphi 0, %s202
      %s217 = sphi 0, %s203
      %s221 = sphi 0, %s221
      %s223 = sphi 0, %s221
      %s224 = sphi 0, %s223
      %s238 = sphi 0, %s224
      %s242 = sphi 0, %s242
      %s244 = sphi 0, %s242
      %s245 = sphi 0, %s244
      %s259 = sphi 0, %s245
      %s263 = sphi 0, %s263
      %s265 = sphi 0, %s263
      %s266 = sphi 0, %s265
      %s280 = sphi 0, %s266
      %s284 = sphi 0, %s284
      %s286 = sphi 0, %s284
      %s287 = sphi 0, %s286
      %s301 = sphi 0, %s287
      %s305 = sphi 0, %s305
      %s307 = sphi 0, %s305
      %s308 = sphi 0, %s307
      %s322 = sphi 0, %s308
      %s326 = sphi 0, %s326
      %s328 = sphi 0, %s326
      %s329 = sphi 0, %s328
      %s343 = sphi 0, %s329
      %s349 = sphi 0, %s351
      %s352 = sphi 0, %s349
      %s353 = sphi 0, %s352
      %s369 = sphi 0, %s353
    $region4: #{tpu_custom_call.1} parent=1 // loop_header_branch
      %33 = sbr.rel (%p31) target = $region8
    $region5: #{tpu_custom_call.1} parent=1 // loop_body
      %s35 = ssub.s32 %s30, 1
      %s36 = ssub.s32 %s30, 2
      %s37 = sadd.s32 %s30, 1
      %s38 = ssub.s32 %s30, %s37
      %p39 = scmp.eq.s32.totalorder %s38, 0
      %s41 = sadd.s32 %s40, 1
      %s42 = scalar_select %p39, %s40, %s41
      %p45 = pneg %p39
      %p46 = scmp.eq.s32.totalorder %s30, 1
      %p47 = por %p45, %p46
      %p48 = scmp.ne.s32.totalorder %s40, %s43
      %p49 = scmp.eq.s32.totalorder %s30, 0
      %p50 = por %p48, %p49
      %p51 = scmp.ne.s32.totalorder %s40, %s43
      %p52 = scmp.eq.s32.totalorder %s35, 1
      %p53 = por %p51, %p52
      %p54 = scmp.ne.s32.totalorder %s43, %s44
      %p55 = scmp.eq.s32.totalorder %s35, 0
      %p56 = por %p54, %p55
      %p57 = scmp.ne.s32.totalorder %s43, %s44
      %p58 = scmp.eq.s32.totalorder %s36, 1
      %p59 = por %p57, %p58
      %p61 = scmp.ne.s32.totalorder %s44, %s60
      %p62 = scmp.eq.s32.totalorder %s36, 0
      %p63 = por %p61, %p62
      %s64 = ssub.s32 %s30, %s37
      %p65 = scmp.eq.s32.totalorder %s64, 0
      %s67 = sadd.s32 %s66, 1
      %s68 = scalar_select %p65, %s66, %s67
      %p71 = pneg %p65
      %p72 = scmp.eq.s32.totalorder %s30, 1
      %p73 = por %p71, %p72
      %p74 = scmp.ne.s32.totalorder %s66, %s69
      %p75 = scmp.eq.s32.totalorder %s30, 0
      %p76 = por %p74, %p75
      %p77 = scmp.ne.s32.totalorder %s66, %s69
      %p78 = scmp.eq.s32.totalorder %s35, 1
      %p79 = por %p77, %p78
      %p80 = scmp.ne.s32.totalorder %s69, %s70
      %p81 = scmp.eq.s32.totalorder %s35, 0
      %p82 = por %p80, %p81
      %p83 = scmp.ne.s32.totalorder %s69, %s70
      %p84 = scmp.eq.s32.totalorder %s36, 1
      %p85 = por %p83, %p84
      %p87 = scmp.ne.s32.totalorder %s70, %s86
      %p88 = scmp.eq.s32.totalorder %s36, 0
      %p89 = por %p87, %p88
      %s90 = ssub.s32 %s30, %s37
      %p91 = scmp.eq.s32.totalorder %s90, 0
      %s93 = sadd.s32 %s92, 1
      %s94 = scalar_select %p91, %s92, %s93
      %p97 = pneg %p91
      %p98 = scmp.eq.s32.totalorder %s30, 1
      %p99 = por %p97, %p98
      %p100 = scmp.ne.s32.totalorder %s92, %s95
      %p101 = scmp.eq.s32.totalorder %s30, 0
      %p102 = por %p100, %p101
      %p103 = scmp.ne.s32.totalorder %s92, %s95
      %p104 = scmp.eq.s32.totalorder %s35, 1
      %p105 = por %p103, %p104
      %p106 = scmp.ne.s32.totalorder %s95, %s96
      %p107 = scmp.eq.s32.totalorder %s35, 0
      %p108 = por %p106, %p107
      %p109 = scmp.ne.s32.totalorder %s95, %s96
      %p110 = scmp.eq.s32.totalorder %s36, 1
      %p111 = por %p109, %p110
      %p113 = scmp.ne.s32.totalorder %s96, %s112
      %p114 = scmp.eq.s32.totalorder %s36, 0
      %p115 = por %p113, %p114
      %s117 = sadd.s32 %s116, 1
      %p120 = scmp.eq.s32.totalorder %s30, 1
      %p121 = scmp.ne.s32.totalorder %s116, %s118
      %p122 = scmp.eq.s32.totalorder %s30, 0
      %p123 = por %p121, %p122
      %p124 = scmp.ne.s32.totalorder %s116, %s118
      %p125 = scmp.eq.s32.totalorder %s35, 1
      %p126 = por %p124, %p125
      %p127 = scmp.ne.s32.totalorder %s118, %s119
      %p128 = scmp.eq.s32.totalorder %s35, 0
      %p129 = por %p127, %p128
      %p130 = scmp.ne.s32.totalorder %s118, %s119
      %p131 = scmp.eq.s32.totalorder %s36, 1
      %p132 = por %p130, %p131
      %p134 = scmp.ne.s32.totalorder %s119, %s133
      %p135 = scmp.eq.s32.totalorder %s36, 0
      %p136 = por %p134, %p135
      %s138 = sadd.s32 %s137, 1
      %p141 = scmp.eq.s32.totalorder %s30, 1
      %p142 = scmp.ne.s32.totalorder %s137, %s139
      %p143 = scmp.eq.s32.totalorder %s30, 0
      %p144 = por %p142, %p143
      %p145 = scmp.ne.s32.totalorder %s137, %s139
      %p146 = scmp.eq.s32.totalorder %s35, 1
      %p147 = por %p145, %p146
      %p148 = scmp.ne.s32.totalorder %s139, %s140
      %p149 = scmp.eq.s32.totalorder %s35, 0
      %p150 = por %p148, %p149
      %p151 = scmp.ne.s32.totalorder %s139, %s140
      %p152 = scmp.eq.s32.totalorder %s36, 1
      %p153 = por %p151, %p152
      %p155 = scmp.ne.s32.totalorder %s140, %s154
      %p156 = scmp.eq.s32.totalorder %s36, 0
      %p157 = por %p155, %p156
      %s159 = sadd.s32 %s158, 1
      %p162 = scmp.eq.s32.totalorder %s30, 1
      %p163 = scmp.ne.s32.totalorder %s158, %s160
      %p164 = scmp.eq.s32.totalorder %s30, 0
      %p165 = por %p163, %p164
      %p166 = scmp.ne.s32.totalorder %s158, %s160
      %p167 = scmp.eq.s32.totalorder %s35, 1
      %p168 = por %p166, %p167
      %p169 = scmp.ne.s32.totalorder %s160, %s161
      %p170 = scmp.eq.s32.totalorder %s35, 0
      %p171 = por %p169, %p170
      %p172 = scmp.ne.s32.totalorder %s160, %s161
      %p173 = scmp.eq.s32.totalorder %s36, 1
      %p174 = por %p172, %p173
      %p176 = scmp.ne.s32.totalorder %s161, %s175
      %p177 = scmp.eq.s32.totalorder %s36, 0
      %p178 = por %p176, %p177
      %s180 = sadd.s32 %s179, 1
      %p183 = scmp.eq.s32.totalorder %s30, 1
      %p184 = scmp.ne.s32.totalorder %s179, %s181
      %p185 = scmp.eq.s32.totalorder %s30, 0
      %p186 = por %p184, %p185
      %p187 = scmp.ne.s32.totalorder %s179, %s181
      %p188 = scmp.eq.s32.totalorder %s35, 1
      %p189 = por %p187, %p188
      %p190 = scmp.ne.s32.totalorder %s181, %s182
      %p191 = scmp.eq.s32.totalorder %s35, 0
      %p192 = por %p190, %p191
      %p193 = scmp.ne.s32.totalorder %s181, %s182
      %p194 = scmp.eq.s32.totalorder %s36, 1
      %p195 = por %p193, %p194
      %p197 = scmp.ne.s32.totalorder %s182, %s196
      %p198 = scmp.eq.s32.totalorder %s36, 0
      %p199 = por %p197, %p198
      %s201 = sadd.s32 %s200, 1
      %p204 = scmp.eq.s32.totalorder %s30, 1
      %p205 = scmp.ne.s32.totalorder %s200, %s202
      %p206 = scmp.eq.s32.totalorder %s30, 0
      %p207 = por %p205, %p206
      %p208 = scmp.ne.s32.totalorder %s200, %s202
      %p209 = scmp.eq.s32.totalorder %s35, 1
      %p210 = por %p208, %p209
      %p211 = scmp.ne.s32.totalorder %s202, %s203
      %p212 = scmp.eq.s32.totalorder %s35, 0
      %p213 = por %p211, %p212
      %p214 = scmp.ne.s32.totalorder %s202, %s203
      %p215 = scmp.eq.s32.totalorder %s36, 1
      %p216 = por %p214, %p215
      %p218 = scmp.ne.s32.totalorder %s203, %s217
      %p219 = scmp.eq.s32.totalorder %s36, 0
      %p220 = por %p218, %p219
      %s222 = sadd.s32 %s221, 1
      %p225 = scmp.eq.s32.totalorder %s30, 1
      %p226 = scmp.ne.s32.totalorder %s221, %s223
      %p227 = scmp.eq.s32.totalorder %s30, 0
      %p228 = por %p226, %p227
      %p229 = scmp.ne.s32.totalorder %s221, %s223
      %p230 = scmp.eq.s32.totalorder %s35, 1
      %p231 = por %p229, %p230
      %p232 = scmp.ne.s32.totalorder %s223, %s224
      %p233 = scmp.eq.s32.totalorder %s35, 0
      %p234 = por %p232, %p233
      %p235 = scmp.ne.s32.totalorder %s223, %s224
      %p236 = scmp.eq.s32.totalorder %s36, 1
      %p237 = por %p235, %p236
      %p239 = scmp.ne.s32.totalorder %s224, %s238
      %p240 = scmp.eq.s32.totalorder %s36, 0
      %p241 = por %p239, %p240
      %s243 = sadd.s32 %s242, 1
      %p246 = scmp.eq.s32.totalorder %s30, 1
      %p247 = scmp.ne.s32.totalorder %s242, %s244
      %p248 = scmp.eq.s32.totalorder %s30, 0
      %p249 = por %p247, %p248
      %p250 = scmp.ne.s32.totalorder %s242, %s244
      %p251 = scmp.eq.s32.totalorder %s35, 1
      %p252 = por %p250, %p251
      %p253 = scmp.ne.s32.totalorder %s244, %s245
      %p254 = scmp.eq.s32.totalorder %s35, 0
      %p255 = por %p253, %p254
      %p256 = scmp.ne.s32.totalorder %s244, %s245
      %p257 = scmp.eq.s32.totalorder %s36, 1
      %p258 = por %p256, %p257
      %p260 = scmp.ne.s32.totalorder %s245, %s259
      %p261 = scmp.eq.s32.totalorder %s36, 0
      %p262 = por %p260, %p261
      %s264 = sadd.s32 %s263, 1
      %p267 = scmp.eq.s32.totalorder %s30, 1
      %p268 = scmp.ne.s32.totalorder %s263, %s265
      %p269 = scmp.eq.s32.totalorder %s30, 0
      %p270 = por %p268, %p269
      %p271 = scmp.ne.s32.totalorder %s263, %s265
      %p272 = scmp.eq.s32.totalorder %s35, 1
      %p273 = por %p271, %p272
      %p274 = scmp.ne.s32.totalorder %s265, %s266
      %p275 = scmp.eq.s32.totalorder %s35, 0
      %p276 = por %p274, %p275
      %p277 = scmp.ne.s32.totalorder %s265, %s266
      %p278 = scmp.eq.s32.totalorder %s36, 1
      %p279 = por %p277, %p278
      %p281 = scmp.ne.s32.totalorder %s266, %s280
      %p282 = scmp.eq.s32.totalorder %s36, 0
      %p283 = por %p281, %p282
      %s285 = sadd.s32 %s284, 1
      %p288 = scmp.eq.s32.totalorder %s30, 1
      %p289 = scmp.ne.s32.totalorder %s284, %s286
      %p290 = scmp.eq.s32.totalorder %s30, 0
      %p291 = por %p289, %p290
      %p292 = scmp.ne.s32.totalorder %s284, %s286
      %p293 = scmp.eq.s32.totalorder %s35, 1
      %p294 = por %p292, %p293
      %p295 = scmp.ne.s32.totalorder %s286, %s287
      %p296 = scmp.eq.s32.totalorder %s35, 0
      %p297 = por %p295, %p296
      %p298 = scmp.ne.s32.totalorder %s286, %s287
      %p299 = scmp.eq.s32.totalorder %s36, 1
      %p300 = por %p298, %p299
      %p302 = scmp.ne.s32.totalorder %s287, %s301
      %p303 = scmp.eq.s32.totalorder %s36, 0
      %p304 = por %p302, %p303
      %s306 = sadd.s32 %s305, 1
      %p309 = scmp.eq.s32.totalorder %s30, 1
      %p310 = scmp.ne.s32.totalorder %s305, %s307
      %p311 = scmp.eq.s32.totalorder %s30, 0
      %p312 = por %p310, %p311
      %p313 = scmp.ne.s32.totalorder %s305, %s307
      %p314 = scmp.eq.s32.totalorder %s35, 1
      %p315 = por %p313, %p314
      %p316 = scmp.ne.s32.totalorder %s307, %s308
      %p317 = scmp.eq.s32.totalorder %s35, 0
      %p318 = por %p316, %p317
      %p319 = scmp.ne.s32.totalorder %s307, %s308
      %p320 = scmp.eq.s32.totalorder %s36, 1
      %p321 = por %p319, %p320
      %p323 = scmp.ne.s32.totalorder %s308, %s322
      %p324 = scmp.eq.s32.totalorder %s36, 0
      %p325 = por %p323, %p324
      %s327 = sadd.s32 %s326, 1
      %p330 = scmp.eq.s32.totalorder %s30, 1
      %p331 = scmp.ne.s32.totalorder %s326, %s328
      %p332 = scmp.eq.s32.totalorder %s30, 0
      %p333 = por %p331, %p332
      %p334 = scmp.ne.s32.totalorder %s326, %s328
      %p335 = scmp.eq.s32.totalorder %s35, 1
      %p336 = por %p334, %p335
      %p337 = scmp.ne.s32.totalorder %s328, %s329
      %p338 = scmp.eq.s32.totalorder %s35, 0
      %p339 = por %p337, %p338
      %p340 = scmp.ne.s32.totalorder %s328, %s329
      %p341 = scmp.eq.s32.totalorder %s36, 1
      %p342 = por %p340, %p341
      %p344 = scmp.ne.s32.totalorder %s329, %s343
      %p345 = scmp.eq.s32.totalorder %s36, 0
      %p346 = por %p344, %p345
      %s347 = ssub.s32 %s30, %s37
      %p348 = scmp.eq.s32.totalorder %s347, 0
      %s350 = sadd.s32 %s349, 1
      %s351 = scalar_select %p348, %s349, %s350
      %p354 = pneg %p348
      %p355 = scmp.eq.s32.totalorder %s30, 1
      %p356 = por %p354, %p355
      %p357 = scmp.ne.s32.totalorder %s349, %s352
      %p358 = scmp.eq.s32.totalorder %s30, 0
      %p359 = por %p357, %p358
      %p360 = scmp.ne.s32.totalorder %s349, %s352
      %p361 = scmp.eq.s32.totalorder %s35, 1
      %p362 = por %p360, %p361
      %p363 = scmp.ne.s32.totalorder %s352, %s353
      %p364 = scmp.eq.s32.totalorder %s35, 0
      %p365 = por %p363, %p364
      %p366 = scmp.ne.s32.totalorder %s352, %s353
      %p367 = scmp.eq.s32.totalorder %s36, 1
      %p368 = por %p366, %p367
      %p370 = scmp.ne.s32.totalorder %s353, %s369
      %p371 = scmp.eq.s32.totalorder %s36, 0
      %p372 = por %p370, %p371
      %p373 = scmp.le.s32.totalorder 1, %s30
      %p374 = scmp.lt.s32.totalorder %s30, 3
      %p375 = pnand %p373, %p374
      %p376 = pneg %p375
      // Predicated region
      $region9: #{tpu_custom_call.1} parent=5 // pred_check
        _
      $region10: #{tpu_custom_call.1} parent=5 // pred_check_branch
        %378 = sbr.rel (%p375) target = $region12
      $region11: #{tpu_custom_call.1} parent=5 // pred_region
        %s379 = ssub.s32 %s30, 1
        // Predicated region
        $region13: #{tpu_custom_call.1} parent=11 // pred_check
          %p380 = pneg %p129
        $region14: #{tpu_custom_call.1} parent=11 // pred_check_branch
          %382 = sbr.rel (%p380) target = $region16
        $region15: #{tpu_custom_call.1} parent=11 // pred_region
          _
        $region16: #{tpu_custom_call.1} parent=11 // pred_fallthru
          _
        // Predicated region
        $region17: #{tpu_custom_call.1} parent=11 // pred_check
          %p383 = pneg %p150
        $region18: #{tpu_custom_call.1} parent=11 // pred_check_branch
          %385 = sbr.rel (%p383) target = $region20
        $region19: #{tpu_custom_call.1} parent=11 // pred_region
          _
        $region20: #{tpu_custom_call.1} parent=11 // pred_fallthru
          _
        // Predicated region
        $region21: #{tpu_custom_call.1} parent=11 // pred_check
          %p386 = pneg %p171
        $region22: #{tpu_custom_call.1} parent=11 // pred_check_branch
          %388 = sbr.rel (%p386) target = $region24
        $region23: #{tpu_custom_call.1} parent=11 // pred_region
          _
        $region24: #{tpu_custom_call.1} parent=11 // pred_fallthru
          _
        // Predicated region
        $region25: #{tpu_custom_call.1} parent=11 // pred_check
          %p389 = pneg %p192
        $region26: #{tpu_custom_call.1} parent=11 // pred_check_branch
          %391 = sbr.rel (%p389) target = $region28
        $region27: #{tpu_custom_call.1} parent=11 // pred_region
          _
        $region28: #{tpu_custom_call.1} parent=11 // pred_fallthru
          _
        // Predicated region
        $region29: #{tpu_custom_call.1} parent=11 // pred_check
          %p392 = pneg %p213
        $region30: #{tpu_custom_call.1} parent=11 // pred_check_branch
          %394 = sbr.rel (%p392) target = $region32
        $region31: #{tpu_custom_call.1} parent=11 // pred_region
          _
        $region32: #{tpu_custom_call.1} parent=11 // pred_fallthru
          _
        // Predicated region
        $region33: #{tpu_custom_call.1} parent=11 // pred_check
          %p395 = pneg %p234
        $region34: #{tpu_custom_call.1} parent=11 // pred_check_branch
          %397 = sbr.rel (%p395) target = $region36
        $region35: #{tpu_custom_call.1} parent=11 // pred_region
          %399 = vsyncadd [#allocation9], 0
          %s400 = sshll.u32 %s8, 4
          %s401 = int_to_ptr.hbm [resolvable:$true] %s400
          %s402 = sshll.u32 [#allocation8], 4
          %s403 = int_to_ptr.vmem [resolvable:$true] %s402
          %408 = dma.hbm_to_vmem [thread:$0]  %s401, 512, %s403, [#allocation9], 128, 128, 8
        $region36: #{tpu_custom_call.1} parent=11 // pred_fallthru
          _
        // Predicated region
        $region37: #{tpu_custom_call.1} parent=11 // pred_check
          %p409 = pneg %p255
        $region38: #{tpu_custom_call.1} parent=11 // pred_check_branch
          %411 = sbr.rel (%p409) target = $region40
        $region39: #{tpu_custom_call.1} parent=11 // pred_region
          _
        $region40: #{tpu_custom_call.1} parent=11 // pred_fallthru
          _
        // Predicated region
        $region41: #{tpu_custom_call.1} parent=11 // pred_check
          %p412 = pneg %p276
        $region42: #{tpu_custom_call.1} parent=11 // pred_check_branch
          %414 = sbr.rel (%p412) target = $region44
        $region43: #{tpu_custom_call.1} parent=11 // pred_region
          _
        $region44: #{tpu_custom_call.1} parent=11 // pred_fallthru
          _
        // Predicated region
        $region45: #{tpu_custom_call.1} parent=11 // pred_check
          %p415 = pneg %p297
        $region46: #{tpu_custom_call.1} parent=11 // pred_check_branch
          %417 = sbr.rel (%p415) target = $region48
        $region47: #{tpu_custom_call.1} parent=11 // pred_region
          _
        $region48: #{tpu_custom_call.1} parent=11 // pred_fallthru
          _
        // Predicated region
        $region49: #{tpu_custom_call.1} parent=11 // pred_check
          %p418 = pneg %p318
        $region50: #{tpu_custom_call.1} parent=11 // pred_check_branch
          %420 = sbr.rel (%p418) target = $region52
        $region51: #{tpu_custom_call.1} parent=11 // pred_region
          _
        $region52: #{tpu_custom_call.1} parent=11 // pred_fallthru
          _
        // Predicated region
        $region53: #{tpu_custom_call.1} parent=11 // pred_check
          %p421 = pneg %p339
        $region54: #{tpu_custom_call.1} parent=11 // pred_check_branch
          %423 = sbr.rel (%p421) target = $region56
        $region55: #{tpu_custom_call.1} parent=11 // pred_region
          _
        $region56: #{tpu_custom_call.1} parent=11 // pred_fallthru
          _
      $region12: #{tpu_custom_call.1} parent=5 // pred_fallthru
        _
      %p424 = scmp.lt.s32.totalorder %s30, 2
      // Predicated region
      $region57: #{tpu_custom_call.1} parent=5 // pred_check
        %p425 = pneg %p424
      $region58: #{tpu_custom_call.1} parent=5 // pred_check_branch
        %427 = sbr.rel (%p425) target = $region60
      $region59: #{tpu_custom_call.1} parent=5 // pred_region
        // Predicated region
        $region61: #{tpu_custom_call.1} parent=59 // pred_check
          %p428 = pneg %p50
        $region62: #{tpu_custom_call.1} parent=59 // pred_check_branch
          %430 = sbr.rel (%p428) target = $region64
        $region63: #{tpu_custom_call.1} parent=59 // pred_region
          %s431 = sand.u32 %s40, 1
          %s432 = scalar_lea.sflag [#allocation3], %s431
          %s433 = sand.u32 %s40, 1
          %s434 = smul.addr %s433, 8
          %s435 = scalar_lea.vmem [#allocation2], %s434
          %437 = vsyncadd %s432, 0
          %s438 = smul.addr %s30, 8
          %s439 = scalar_lea.hbm %s0, %s438
          %s441 = sshll.u32 %s439, 4
          %s442 = int_to_ptr.hbm [resolvable:$true] %s441
          %s443 = sshll.u32 %s435, 4
          %s444 = int_to_ptr.vmem [resolvable:$true] %s443
          %446 = dma.hbm_to_vmem [thread:$0]  %s442, 128, %s444, %s432
        $region64: #{tpu_custom_call.1} parent=59 // pred_fallthru
          _
        // Predicated region
        $region65: #{tpu_custom_call.1} parent=59 // pred_check
          %p447 = pneg %p76
        $region66: #{tpu_custom_call.1} parent=59 // pred_check_branch
          %449 = sbr.rel (%p447) target = $region68
        $region67: #{tpu_custom_call.1} parent=59 // pred_region
          %s450 = sand.u32 %s30, 1
          %s451 = scalar_lea.sflag [#allocation6], %s450
          %s452 = sand.u32 %s66, 1
          %s453 = smul.addr %s452, 8
          %s454 = scalar_lea.vmem [#allocation5], %s453
          %456 = vsyncadd %s451, 0
          %s457 = smul.addr %s30, 8
          %s458 = scalar_lea.hbm %s1, %s457
          %s460 = sshll.u32 %s458, 4
          %s461 = int_to_ptr.hbm [resolvable:$true] %s460
          %s462 = sshll.u32 %s454, 4
          %s463 = int_to_ptr.vmem [resolvable:$true] %s462
          %465 = dma.hbm_to_vmem [thread:$0]  %s461, 128, %s463, %s451
        $region68: #{tpu_custom_call.1} parent=59 // pred_fallthru
          _
        // Predicated region
        $region69: #{tpu_custom_call.1} parent=59 // pred_check
          %p466 = pneg %p102
        $region70: #{tpu_custom_call.1} parent=59 // pred_check_branch
          %468 = sbr.rel (%p466) target = $region72
        $region71: #{tpu_custom_call.1} parent=59 // pred_region
          %s469 = sand.u32 %s30, 1
          %s470 = scalar_lea.sflag [#allocation6], %s469
          %s471 = sand.u32 %s92, 1
          %s472 = smul.addr %s471, 8
          %s473 = scalar_lea.vmem [#allocation7], %s472
          %475 = vsyncadd %s470, 0
          %s476 = smul.addr %s30, 8
          %s477 = scalar_lea.hbm %s2, %s476
          %s479 = sshll.u32 %s477, 4
          %s480 = int_to_ptr.hbm [resolvable:$true] %s479
          %s481 = sshll.u32 %s473, 4
          %s482 = int_to_ptr.vmem [resolvable:$true] %s481
          %484 = dma.hbm_to_vmem [thread:$0]  %s480, 128, %s482, %s470
        $region72: #{tpu_custom_call.1} parent=59 // pred_fallthru
          _
      $region60: #{tpu_custom_call.1} parent=5 // pred_fallthru
        _
      %p485 = scmp.le.s32.totalorder 1, %s30
      %p486 = scmp.lt.s32.totalorder %s30, 3
      %p487 = pnand %p485, %p486
      %p488 = pneg %p487
      // Predicated region
      $region73: #{tpu_custom_call.1} parent=5 // pred_check
        _
      $region74: #{tpu_custom_call.1} parent=5 // pred_check_branch
        %490 = sbr.rel (%p487) target = $region76
      $region75: #{tpu_custom_call.1} parent=5 // pred_region
        %s491 = ssub.s32 %s30, 1
        %s492 = sand.u32 %s43, 1
        %s493 = scalar_lea.sflag [#allocation3], %s492
        %s494 = sand.u32 %s43, 1
        %s495 = smul.addr %s494, 8
        %s496 = scalar_lea.vmem [#allocation2], %s495
        // Predicated region
        $region77: #{tpu_custom_call.1} parent=75 // pred_check
          %p497 = pneg %p56
        $region78: #{tpu_custom_call.1} parent=75 // pred_check_branch
          %499 = sbr.rel (%p497) target = $region80
        $region79: #{tpu_custom_call.1} parent=75 // pred_region
          %501 = dma.done %s493, 128
        $region80: #{tpu_custom_call.1} parent=75 // pred_fallthru
          _
        %s502 = sand.u32 %s35, 1
        %s503 = scalar_lea.sflag [#allocation6], %s502
        %s504 = sand.u32 %s69, 1
        %s505 = smul.addr %s504, 8
        %s506 = scalar_lea.vmem [#allocation5], %s505
        // Predicated region
        $region81: #{tpu_custom_call.1} parent=75 // pred_check
          %p507 = pneg %p82
        $region82: #{tpu_custom_call.1} parent=75 // pred_check_branch
          %509 = sbr.rel (%p507) target = $region84
        $region83: #{tpu_custom_call.1} parent=75 // pred_region
          %511 = dma.done %s503, 128
        $region84: #{tpu_custom_call.1} parent=75 // pred_fallthru
          _
        %s512 = sand.u32 %s35, 1
        %s513 = scalar_lea.sflag [#allocation6], %s512
        %s514 = sand.u32 %s95, 1
        %s515 = smul.addr %s514, 8
        %s516 = scalar_lea.vmem [#allocation7], %s515
        // Predicated region
        $region85: #{tpu_custom_call.1} parent=75 // pred_check
          %p517 = pneg %p108
        $region86: #{tpu_custom_call.1} parent=75 // pred_check_branch
          %519 = sbr.rel (%p517) target = $region88
        $region87: #{tpu_custom_call.1} parent=75 // pred_region
          %521 = dma.done %s513, 128
        $region88: #{tpu_custom_call.1} parent=75 // pred_fallthru
          _
        // Predicated region
        $region89: #{tpu_custom_call.1} parent=75 // pred_check
          %p522 = pneg %p234
        $region90: #{tpu_custom_call.1} parent=75 // pred_check_branch
          %524 = sbr.rel (%p522) target = $region92
        $region91: #{tpu_custom_call.1} parent=75 // pred_region
          %526 = dma.done [#allocation9], 512
        $region92: #{tpu_custom_call.1} parent=75 // pred_fallthru
          _
        %s527 = sand.u32 %s43, 1
        %s528 = scalar_lea.sflag [#allocation3], %s527
        %s529 = sand.u32 %s43, 1
        %s530 = smul.addr %s529, 8
        %s531 = scalar_lea.vmem [#allocation2], %s530
        %p532 = pneg %p56
        %p533 = pneg %p53
        %s534 = sand.u32 %s35, 1
        %s535 = scalar_lea.sflag [#allocation6], %s534
        %s536 = sand.u32 %s69, 1
        %s537 = smul.addr %s536, 8
        %s538 = scalar_lea.vmem [#allocation5], %s537
        %p539 = pneg %p82
        %p540 = pneg %p79
        %s541 = sand.u32 %s35, 1
        %s542 = scalar_lea.sflag [#allocation6], %s541
        %s543 = sand.u32 %s95, 1
        %s544 = smul.addr %s543, 8
        %s545 = scalar_lea.vmem [#allocation7], %s544
        %p546 = pneg %p108
        %p547 = pneg %p105
        %p548 = pneg %p129
        %p549 = pneg %p126
        %p550 = pneg %p150
        %p551 = pneg %p147
        %p552 = pneg %p171
        %p553 = pneg %p168
        %p554 = pneg %p192
        %p555 = pneg %p189
        %p556 = pneg %p213
        %p557 = pneg %p210
        %p558 = pneg %p234
        %p559 = pneg %p231
        %p560 = pneg %p255
        %p561 = pneg %p252
        %p562 = pneg %p276
        %p563 = pneg %p273
        %p564 = pneg %p297
        %p565 = pneg %p294
        %p566 = pneg %p318
        %p567 = pneg %p315
        %p568 = pneg %p339
        %p569 = pneg %p336
        %p570 = pneg %p365
        %p571 = pneg %p362
        %s572 = sand.u32 %s352, 1
        %s573 = scalar_lea.sflag [#allocation4], %s572
        %s574 = sand.u32 %s352, 1
        %s575 = smul.addr %s574, 8
        %s576 = scalar_lea.vmem [#allocation10], %s575
        %v577 = vld [vmem:[%s496] sm:$0xff]
        %v578 = vld [vmem:[%s3] sm:$0xff]
        %v579 = vld [vmem:[%s3 + $0x8] sm:$0xff]
        %v580 = vld [vmem:[%s3 + $0x10] sm:$0xff]
        %v581 = vld [vmem:[%s3 + $0x18] sm:$0xff]
        %v582 = vld [vmem:[%s4] sm:$0x1]
        %v584 = vperm.slane %v582, 0
        %vm586 = vcmask 261120
        %v588 = vsel %vm586, %v577, 0
        %590 = vmatpush.msra.mxu0 0.0
        %591 = vmatpush.msra.mxu0 0.0
        %592 = vmatpush.msra.mxu0 0.0
        %593 = vmatpush.msra.mxu0 0.0
        %594 = vmatpush.msra.mxu0 0.0
        %595 = vmatpush.msra.mxu0 0.0
        %596 = vmatpush.msra.mxu0 0.0
        %597 = vmatpush.msra.mxu0 0.0
        %598 = vmatpush.msra.mxu0 0.0
        %599 = vmatpush.msra.mxu0 0.0
        %600 = vmatpush.msra.mxu0 0.0
        %601 = vmatpush.msra.mxu0 0.0
        %602 = vmatpush.msra.mxu0 %v581
        %603 = vmatpush.msra.mxu0 %v580
        %604 = vmatpush.msra.mxu0 %v579
        %605 = vmatpush.msra.mxu0 %v578
        %606 = vmatmul.f32.gmra.mxu0 %v588
        %v607 = vpop.f32.mrf.mxu0
        %v608 = vadd.f32 %v584, %v607
        %609 = vdwg.mxu0
        %v610 = vld [vmem:[%s506] sm:$0xff]
        %v611 = vld [vmem:[%s516] sm:$0xff]
        %v612 = vld [vmem:[%s5] sm:$0xff]
        %v613 = vld [vmem:[%s5 + $0x8] sm:$0xff]
        %v614 = vld [vmem:[%s5 + $0x10] sm:$0xff]
        %v615 = vld [vmem:[%s5 + $0x18] sm:$0xff]
        %v616 = vld [vmem:[%s6] sm:$0x1]
        %v618 = vperm.slane %v616, 0
        %621 = vrot.lane.b32.xlu0 %v608, 120
        %v622 = vpop.permute.xlu0 %621
        %624 = vrot.lane.b32.xlu0 %v608, 8
        %v625 = vpop.permute.xlu0 %624
        %vm627 = vcmask 64512
        %v628 = vsel %vm627, %v622, %v625
        %v629 = vmul.f32 %v608, %v610
        %v630 = vmul.f32 %v628, %v611
        %v631 = vadd.f32 %v629, %v630
        %632 = vrot.lane.b32.xlu0 %v608, 88
        %v633 = vpop.permute.xlu0 %632
        %635 = vrot.lane.b32.xlu0 %v608, 104
        %v636 = vpop.permute.xlu0 %635
        %v638 = vsel %vm627, %v633, %v636
        %640 = vrot.lane.b32.xlu0 %v610, 32
        %v641 = vpop.permute.xlu0 %640
        %v643 = vmul.f32 %v608, %v641
        %v644 = vmul.f32 %v638, %v611
        %646 = vrot.lane.b32.xlu0 %v644, 32
        %v647 = vpop.permute.xlu0 %646
        %v649 = vadd.f32 %v643, %v647
        %651 = vrot.lane.b32.xlu0 %v649, 96
        %v652 = vpop.permute.xlu0 %651
        %vm653 = vcmask 130048
        %v655 = vsel %vm653, %v631, 0
        %v657 = vsel %vm653, %v652, 0
        %659 = vmatpush.xpose.msra.mxu0 0.0
        %660 = vmatpush.xpose.msra.mxu0 0.0
        %661 = vmatpush.xpose.msra.mxu0 0.0
        %662 = vmatpush.xpose.msra.mxu0 0.0
        %663 = vmatpush.xpose.msra.mxu0 0.0
        %664 = vmatpush.xpose.msra.mxu0 0.0
        %665 = vmatpush.xpose.msra.mxu0 0.0
        %666 = vmatpush.xpose.msra.mxu0 0.0
        %667 = vmatpush.xpose.msra.mxu0 0.0
        %668 = vmatpush.xpose.msra.mxu0 0.0
        %669 = vmatpush.xpose.msra.mxu0 0.0
        %670 = vmatpush.xpose.msra.mxu0 0.0
        %671 = vmatpush.xpose.msra.mxu0 0.0
        %672 = vmatpush.xpose.msra.mxu0 0.0
        %673 = vmatpush.xpose.msra.mxu0 0.0
        %674 = vmatpush.xpose.msra.mxu0 %v657
        %675 = vmatmul.f32.gmra.mxu0 %v655
        %v676 = vpop.f32.mrf.mxu0
        %v677 = vadd.f32 0.0, %v676
        %678 = vdwg.mxu0
        %v679 = vsel %vm627, %v677, -inf
        %680 = vmax.xlane.f32.xlu0 %v679
        %v681 = vpop.xlane.xlu0 %680
        %v682 = vsub.f32 %v677, %v681
        %v683 = vmul.f32 %v682, 1.442695
        %v684 = vpow.pop %v683
        %v685 = vsel %vm627, %v684, 0.0
        %686 = vadd.xlane.f32.xlu0 %v685
        %v687 = vpop.xlane.xlu0 %686
        %v688 = vrcp.pop %v687
        %v689 = vmul.f32 %v687, %v688
        %v690 = vsub.f32 1.0, %v689
        %v691 = vmul.f32 %v688, %v690
        %v692 = vadd.f32 %v688, %v691
        %vm693 = vweird.f32 %v687
        %vm694 = vweird.f32 %v688
        %vm695 = vmor %vm693, %vm694
        %v696 = vsel %vm695, %v688, %v692
        %v697 = vand.u32 2147483647, %v687
        %vm698 = vcmp.eq.f32.partialorder %v697, 8.507059e+37
        %v699 = vand.u32 %v687, 2147483648
        %v700 = vor.u32 1.1754944e-38, %v699
        %v701 = vsel %vm698, %v700, %v696
        %v702 = vmul.f32 %v684, %v701
        %703 = vrot.lane.b32.xlu0 %v608, 64
        %v704 = vpop.permute.xlu0 %703
        %v707 = vsel %vm627, %v702, 0
        %709 = vmatpush.msra.mxu0 0.0
        %710 = vmatpush.msra.mxu0 0.0
        %711 = vmatpush.msra.mxu0 0.0
        %712 = vmatpush.msra.mxu0 0.0
        %713 = vmatpush.msra.mxu0 0.0
        %714 = vmatpush.msra.mxu0 0.0
        %715 = vmatpush.msra.mxu0 0.0
        %716 = vmatpush.msra.mxu0 0.0
        %717 = vmatpush.msra.mxu0 0.0
        %718 = vmatpush.msra.mxu0 0.0
        %719 = vmatpush.msra.mxu0 0.0
        %720 = vmatpush.msra.mxu0 0.0
        %721 = vmatpush.msra.mxu0 0.0
        %722 = vmatpush.msra.mxu0 0.0
        %723 = vmatpush.msra.mxu0 0.0
        %724 = vmatpush.msra.mxu0 %v704
        %725 = vmatmul.f32.gmra.mxu0 %v707
        %v726 = vpop.f32.mrf.mxu0
        %v727 = vadd.f32 0.0, %v726
        %728 = vdwg.mxu0
        %v730 = vsel %vm653, %v727, 0
        %732 = vmatpush.msra.mxu0 0.0
        %733 = vmatpush.msra.mxu0 0.0
        %734 = vmatpush.msra.mxu0 0.0
        %735 = vmatpush.msra.mxu0 0.0
        %736 = vmatpush.msra.mxu0 0.0
        %737 = vmatpush.msra.mxu0 0.0
        %738 = vmatpush.msra.mxu0 0.0
        %739 = vmatpush.msra.mxu0 0.0
        %740 = vmatpush.msra.mxu0 0.0
        %741 = vmatpush.msra.mxu0 0.0
        %742 = vmatpush.msra.mxu0 0.0
        %743 = vmatpush.msra.mxu0 0.0
        %744 = vmatpush.msra.mxu0 0.0
        %745 = vmatpush.msra.mxu0 0.0
        %746 = vmatpush.msra.mxu0 %v613
        %747 = vmatpush.msra.mxu0 %v612
        %748 = vmatmul.f32.gmra.mxu0 %v730
        %v749 = vpop.f32.mrf.mxu0
        %v750 = vadd.f32 0.0, %v749
        %751 = vdwg.mxu0
        %v752 = vadd.f32 %v618, %v750
        %v753 = vsel %vm627, %v636, %v622
        %754 = vrot.lane.b32.xlu0 %v610, 16
        %v755 = vpop.permute.xlu0 %754
        %v757 = vmul.f32 %v608, %v755
        %v758 = vmul.f32 %v753, %v611
        %760 = vrot.lane.b32.xlu0 %v758, 16
        %v761 = vpop.permute.xlu0 %760
        %v763 = vadd.f32 %v757, %v761
        %764 = vrot.lane.b32.xlu0 %v608, 72
        %v765 = vpop.permute.xlu0 %764
        %v767 = vsel %vm627, %v765, %v633
        %768 = vrot.lane.b32.xlu0 %v610, 48
        %v769 = vpop.permute.xlu0 %768
        %v771 = vmul.f32 %v608, %v769
        %v772 = vmul.f32 %v767, %v611
        %774 = vrot.lane.b32.xlu0 %v772, 48
        %v775 = vpop.permute.xlu0 %774
        %v777 = vadd.f32 %v771, %v775
        %779 = vrot.lane.b32.xlu0 %v763, 112
        %v780 = vpop.permute.xlu0 %779
        %782 = vrot.lane.b32.xlu0 %v777, 80
        %v783 = vpop.permute.xlu0 %782
        %v784 = vsel %vm653, %v780, 0
        %v786 = vsel %vm653, %v783, 0
        %788 = vmatpush.xpose.msra.mxu0 0.0
        %789 = vmatpush.xpose.msra.mxu0 0.0
        %790 = vmatpush.xpose.msra.mxu0 0.0
        %791 = vmatpush.xpose.msra.mxu0 0.0
        %792 = vmatpush.xpose.msra.mxu0 0.0
        %793 = vmatpush.xpose.msra.mxu0 0.0
        %794 = vmatpush.xpose.msra.mxu0 0.0
        %795 = vmatpush.xpose.msra.mxu0 0.0
        %796 = vmatpush.xpose.msra.mxu0 0.0
        %797 = vmatpush.xpose.msra.mxu0 0.0
        %798 = vmatpush.xpose.msra.mxu0 0.0
        %799 = vmatpush.xpose.msra.mxu0 0.0
        %800 = vmatpush.xpose.msra.mxu0 0.0
        %801 = vmatpush.xpose.msra.mxu0 0.0
        %802 = vmatpush.xpose.msra.mxu0 0.0
        %803 = vmatpush.xpose.msra.mxu0 %v786
        %804 = vmatmul.f32.gmra.mxu0 %v784
        %v805 = vpop.f32.mrf.mxu0
        %v806 = vadd.f32 0.0, %v805
        %807 = vdwg.mxu0
        %v808 = vsel %vm627, %v806, -inf
        %809 = vmax.xlane.f32.xlu0 %v808
        %v810 = vpop.xlane.xlu0 %809
        %v811 = vsub.f32 %v806, %v810
        %v812 = vmul.f32 %v811, 1.442695
        %v813 = vpow.pop %v812
        %v814 = vsel %vm627, %v813, 0.0
        %815 = vadd.xlane.f32.xlu0 %v814
        %v816 = vpop.xlane.xlu0 %815
        %v817 = vrcp.pop %v816
        %v818 = vmul.f32 %v816, %v817
        %v819 = vsub.f32 1.0, %v818
        %v820 = vmul.f32 %v817, %v819
        %v821 = vadd.f32 %v817, %v820
        %vm822 = vweird.f32 %v816
        %vm823 = vweird.f32 %v817
        %vm824 = vmor %vm822, %vm823
        %v825 = vsel %vm824, %v817, %v821
        %v826 = vand.u32 2147483647, %v816
        %vm827 = vcmp.eq.f32.partialorder %v826, 8.507059e+37
        %v828 = vand.u32 %v816, 2147483648
        %v829 = vor.u32 1.1754944e-38, %v828
        %v830 = vsel %vm827, %v829, %v825
        %v831 = vmul.f32 %v813, %v830
        %832 = vrot.lane.b32.xlu0 %v608, 48
        %v833 = vpop.permute.xlu0 %832
        %v836 = vsel %vm627, %v831, 0
        %838 = vmatpush.msra.mxu0 0.0
        %839 = vmatpush.msra.mxu0 0.0
        %840 = vmatpush.msra.mxu0 0.0
        %841 = vmatpush.msra.mxu0 0.0
        %842 = vmatpush.msra.mxu0 0.0
        %843 = vmatpush.msra.mxu0 0.0
        %844 = vmatpush.msra.mxu0 0.0
        %845 = vmatpush.msra.mxu0 0.0
        %846 = vmatpush.msra.mxu0 0.0
        %847 = vmatpush.msra.mxu0 0.0
        %848 = vmatpush.msra.mxu0 0.0
        %849 = vmatpush.msra.mxu0 0.0
        %850 = vmatpush.msra.mxu0 0.0
        %851 = vmatpush.msra.mxu0 0.0
        %852 = vmatpush.msra.mxu0 0.0
        %853 = vmatpush.msra.mxu0 %v833
        %854 = vmatmul.f32.gmra.mxu0 %v836
        %v855 = vpop.f32.mrf.mxu0
        %v856 = vadd.f32 0.0, %v855
        %857 = vdwg.mxu0
        %v859 = vsel %vm653, %v856, 0
        %861 = vmatpush.msra.mxu0 0.0
        %862 = vmatpush.msra.mxu0 0.0
        %863 = vmatpush.msra.mxu0 0.0
        %864 = vmatpush.msra.mxu0 0.0
        %865 = vmatpush.msra.mxu0 0.0
        %866 = vmatpush.msra.mxu0 0.0
        %867 = vmatpush.msra.mxu0 0.0
        %868 = vmatpush.msra.mxu0 0.0
        %869 = vmatpush.msra.mxu0 0.0
        %870 = vmatpush.msra.mxu0 0.0
        %871 = vmatpush.msra.mxu0 0.0
        %872 = vmatpush.msra.mxu0 0.0
        %873 = vmatpush.msra.mxu0 0.0
        %874 = vmatpush.msra.mxu0 0.0
        %875 = vmatpush.msra.mxu0 %v615
        %876 = vmatpush.msra.mxu0 %v614
        %877 = vmatmul.f32.gmra.mxu0 %v859
        %v878 = vpop.f32.mrf.mxu0
        %v879 = vadd.f32 0.0, %v878
        %880 = vdwg.mxu0
        %v881 = vadd.f32 %v752, %v879
        %v882 = vld [vmem:[%s7] sm:$0xff]
        %v883 = vld [vmem:[%s7 + $0x8] sm:$0xff]
        %v884 = vld [vmem:[%s7 + $0x10] sm:$0xff]
        %v885 = vld [vmem:[%s7 + $0x18] sm:$0xff]
        %v886 = vld [vmem:[#allocation8] sm:$0xff]
        %v887 = vld [vmem:[#allocation8 + $0x8] sm:$0xff]
        %v888 = vld [vmem:[#allocation8 + $0x10] sm:$0xff]
        %v889 = vld [vmem:[#allocation8 + $0x18] sm:$0xff]
        %v891 = vsel %vm586, %v881, 0
        %893 = vmatpush.msra.mxu0 0.0
        %894 = vmatpush.msra.mxu0 0.0
        %895 = vmatpush.msra.mxu0 0.0
        %896 = vmatpush.msra.mxu0 0.0
        %897 = vmatpush.msra.mxu0 0.0
        %898 = vmatpush.msra.mxu0 0.0
        %899 = vmatpush.msra.mxu0 0.0
        %900 = vmatpush.msra.mxu0 0.0
        %901 = vmatpush.msra.mxu0 0.0
        %902 = vmatpush.msra.mxu0 0.0
        %903 = vmatpush.msra.mxu0 0.0
        %904 = vmatpush.msra.mxu0 0.0
        %905 = vmatpush.msra.mxu0 %v889
        %906 = vmatpush.msra.mxu0 %v888
        %907 = vmatpush.msra.mxu0 %v887
        %908 = vmatpush.msra.mxu0 %v886
        %909 = vmatmul.f32.gmra.mxu0 %v891
        %v910 = vpop.f32.mrf.mxu0
        %v911 = vadd.f32 0.0, %v910
        %912 = vdwg.mxu0
        %913 = vmatpush.msra.mxu0 0.0
        %914 = vmatpush.msra.mxu0 0.0
        %915 = vmatpush.msra.mxu0 0.0
        %916 = vmatpush.msra.mxu0 0.0
        %917 = vmatpush.msra.mxu0 0.0
        %918 = vmatpush.msra.mxu0 0.0
        %919 = vmatpush.msra.mxu0 0.0
        %920 = vmatpush.msra.mxu0 0.0
        %921 = vmatpush.msra.mxu0 0.0
        %922 = vmatpush.msra.mxu0 0.0
        %923 = vmatpush.msra.mxu0 0.0
        %924 = vmatpush.msra.mxu0 0.0
        %925 = vmatpush.msra.mxu0 %v885
        %926 = vmatpush.msra.mxu0 %v884
        %927 = vmatpush.msra.mxu0 %v883
        %928 = vmatpush.msra.mxu0 %v882
        %929 = vmatmul.f32.gmra.mxu0 %v588
        %v930 = vpop.f32.mrf.mxu0
        %v931 = vadd.f32 %v911, %v930
        %932 = vdwg.mxu0
        %v933 = vld [vmem:[%s9] sm:$0x1]
        %v935 = vperm.slane %v933, 0
        %v937 = vadd.f32 %v931, %v935
        %vm938 = vcmask 523264
        %v939 = vsel %vm938, %v937, 0.0
        %940 = vadd.xlane.f32.xlu0 %v939
        %v941 = vpop.xlane.xlu0 %940
        %v942 = vrcp.pop 64.0
        %v943 = vmul.f32 64.0, %v942
        %v944 = vsub.f32 1.0, %v943
        %v945 = vmul.f32 %v942, %v944
        %v946 = vadd.f32 %v942, %v945
        %vm947 = vweird.f32 %v942
        %v948 = vsel %vm947, %v942, %v946
        %v949 = vmul.f32 %v941, %v948
        %v950 = vsub.f32 %v937, %v949
        %v951 = vmul.f32 %v950, %v950
        %v952 = vsel %vm938, %v951, 0.0
        %953 = vadd.xlane.f32.xlu0 %v952
        %v954 = vpop.xlane.xlu0 %953
        %v955 = vmul.f32 %v954, %v948
        %v956 = vadd.f32 %v955, 1e-05
        %v957 = vrsqrt.pop %v956
        %v958 = vmul.f32 %v957, %v956
        %v959 = vmul.f32 %v958, %v957
        %v960 = vmul.f32 0.5, %v959
        %v961 = vsub.f32 1.5, %v960
        %v962 = vmul.f32 %v957, %v961
        %vm963 = vweird.f32 %v956
        %vm964 = vweird.f32 %v957
        %vm965 = vmor %vm963, %vm964
        %v966 = vsel %vm965, %v957, %v962
        %v967 = vmul.f32 %v950, %v966
        %v968 = vld [vmem:[%s10] sm:$0x1]
        %v970 = vperm.slane %v968, 0
        %v972 = vmul.f32 %v967, %v970
        %v973 = vld [vmem:[%s11] sm:$0x1]
        %v975 = vperm.slane %v973, 0
        %v977 = vadd.f32 %v972, %v975
        %v978 = vmul.f32 %v977, 0.5
        %v979 = vmul.f32 %v977, 0.70710677
        %vm980 = vcmp.ge.f32.partialorder %v979, 0.0
        %v981 = vsel %vm980, 1.0, -1.0
        %v982 = vand.u32 2147483647, %v979
        %v983 = vmul.f32 %v982, 0.3275911
        %v984 = vadd.f32 %v983, 1.0
        %v985 = vrcp.pop %v984
        %v986 = vmul.f32 %v984, %v985
        %v987 = vsub.f32 1.0, %v986
        %v988 = vmul.f32 %v985, %v987
        %v989 = vadd.f32 %v985, %v988
        %vm990 = vweird.f32 %v984
        %vm991 = vweird.f32 %v985
        %vm992 = vmor %vm990, %vm991
        %v993 = vsel %vm992, %v985, %v989
        %v994 = vand.u32 2147483647, %v984
        %vm995 = vcmp.eq.f32.partialorder %v994, 8.507059e+37
        %v996 = vand.u32 %v984, 2147483648
        %v997 = vor.u32 1.1754944e-38, %v996
        %v998 = vsel %vm995, %v997, %v993
        %v999 = vmul.f32 1.0, %v998
        %v1000 = vmul.f32 %v999, 1.0614054
        %v1001 = vadd.f32 %v1000, -1.4531521
        %v1002 = vmul.f32 %v1001, %v999
        %v1003 = vadd.f32 %v1002, 1.4214138
        %v1004 = vmul.f32 %v1003, %v999
        %v1005 = vadd.f32 %v1004, -0.28449672
        %v1006 = vmul.f32 %v1005, %v999
        %v1007 = vadd.f32 %v1006, 0.2548296
        %v1008 = vmul.f32 %v1007, %v999
        %v1009 = vsub.f32 0.0, %v982
        %v1010 = vmul.f32 %v1009, %v982
        %v1011 = vmul.f32 %v1010, 1.442695
        %v1012 = vpow.pop %v1011
        %v1013 = vmul.f32 %v1008, %v1012
        %v1014 = vsub.f32 1.0, %v1013
        %v1015 = vmul.f32 %v981, %v1014
        %v1016 = vadd.f32 %v1015, 1.0
        %v1017 = vmul.f32 %v978, %v1016
        %v1018 = vld [vmem:[%s12] sm:$0xff]
        %v1019 = vld [vmem:[%s12 + $0x8] sm:$0xff]
        %v1020 = vld [vmem:[%s12 + $0x10] sm:$0xff]
        %v1021 = vld [vmem:[%s12 + $0x18] sm:$0xff]
        %v1022 = vld [vmem:[%s12 + $0x20] sm:$0xff]
        %v1023 = vld [vmem:[%s12 + $0x28] sm:$0xff]
        %v1024 = vld [vmem:[%s12 + $0x30] sm:$0xff]
        %v1025 = vld [vmem:[%s12 + $0x38] sm:$0xff]
        %v1027 = vsel %vm938, %v1017, 0
        %1029 = vmatpush.msra.mxu0 0.0
        %1030 = vmatpush.msra.mxu0 0.0
        %1031 = vmatpush.msra.mxu0 0.0
        %1032 = vmatpush.msra.mxu0 0.0
        %1033 = vmatpush.msra.mxu0 0.0
        %1034 = vmatpush.msra.mxu0 0.0
        %1035 = vmatpush.msra.mxu0 0.0
        %1036 = vmatpush.msra.mxu0 0.0
        %1037 = vmatpush.msra.mxu0 %v1025
        %1038 = vmatpush.msra.mxu0 %v1024
        %1039 = vmatpush.msra.mxu0 %v1023
        %1040 = vmatpush.msra.mxu0 %v1022
        %1041 = vmatpush.msra.mxu0 %v1021
        %1042 = vmatpush.msra.mxu0 %v1020
        %1043 = vmatpush.msra.mxu0 %v1019
        %1044 = vmatpush.msra.mxu0 %v1018
        %1045 = vmatmul.f32.gmra.mxu0 %v1027
        %v1046 = vpop.f32.mrf.mxu0
        %v1047 = vadd.f32 0.0, %v1046
        %1048 = vdwg.mxu0
        %v1049 = vadd.f32 %v577, %v1047
        %v1050 = vld [vmem:[%s13] sm:$0x1]
        %v1052 = vperm.slane %v1050, 0
        %v1054 = vadd.f32 %v1049, %v1052
        %1055 = vst.msk [vmem:[%s576] sm:$0xff] %vm586, %v1054
        %s1056 = sand.u32 %s352, 1
        %s1057 = scalar_lea.sflag [#allocation4], %s1056
        %s1058 = sand.u32 %s352, 1
        %s1059 = smul.addr %s1058, 8
        %s1060 = scalar_lea.vmem [#allocation10], %s1059
        // Predicated region
        $region93: #{tpu_custom_call.1} parent=75 // pred_check
          %p1061 = pneg %p362
        $region94: #{tpu_custom_call.1} parent=75 // pred_check_branch
          %1063 = sbr.rel (%p1061) target = $region96
        $region95: #{tpu_custom_call.1} parent=75 // pred_region
          %1065 = vsyncadd %s1057, 0
          %s1066 = smul.addr %s35, 8
          %s1067 = scalar_lea.hbm %s14, %s1066
          %s1069 = sshll.u32 %s1060, 4
          %s1070 = int_to_ptr.vmem [resolvable:$true] %s1069
          %s1071 = sshll.u32 %s1067, 4
          %s1072 = int_to_ptr.hbm [resolvable:$true] %s1071
          %1074 = dma.vmem_to_hbm [thread:$0]  %s1070, 128, %s1072, %s1057
        $region96: #{tpu_custom_call.1} parent=75 // pred_fallthru
          _
      $region76: #{tpu_custom_call.1} parent=5 // pred_fallthru
        _
      %p1075 = scmp.le.s32.totalorder 2, %s30
      // Predicated region
      $region97: #{tpu_custom_call.1} parent=5 // pred_check
        %p1076 = pneg %p1075
      $region98: #{tpu_custom_call.1} parent=5 // pred_check_branch
        %1078 = sbr.rel (%p1076) target = $region100
      $region99: #{tpu_custom_call.1} parent=5 // pred_region
        %s1079 = ssub.s32 %s30, 2
        // Predicated region
        $region101: #{tpu_custom_call.1} parent=99 // pred_check
          %p1080 = pneg %p368
        $region102: #{tpu_custom_call.1} parent=99 // pred_check_branch
          %1082 = sbr.rel (%p1080) target = $region104
        $region103: #{tpu_custom_call.1} parent=99 // pred_region
          %s1083 = sand.u32 %s353, 1
          %s1084 = scalar_lea.sflag [#allocation4], %s1083
          %s1085 = sand.u32 %s353, 1
          %s1086 = smul.addr %s1085, 8
          %s1087 = scalar_lea.vmem [#allocation10], %s1086
          %1089 = dma.done %s1084, 128
        $region104: #{tpu_custom_call.1} parent=99 // pred_fallthru
          _
      $region100: #{tpu_custom_call.1} parent=5 // pred_fallthru
        _
    $region6: #{tpu_custom_call.1} parent=1 // loop_footer
      %s34 = sadd.s32 1, %s30
    $region7: #{tpu_custom_call.1} parent=1 // loop_footer_branch
      %29 = sbr.rel target = $region3
    $region8: #{tpu_custom_call.1} parent=1 // loop_exit
      _
    %1090 = vsyncpa [#allocation3], 1
    %s1091 = scalar_lea.sflag [#allocation3], 1
    %1092 = vsyncpa %s1091, 1
    %1093 = vsyncpa [#allocation6], 1
    %s1094 = scalar_lea.sflag [#allocation6], 1
    %1095 = vsyncpa %s1094, 1
    %1096 = vsyncpa [#allocation9], 1
    %1097 = vsyncpa [#allocation4], 1
    %s1098 = scalar_lea.sflag [#allocation4], 1
    %1099 = vsyncpa %s1098, 1

</llo_original>
